<compile_context>
chip_gen: v7x
topology: tpu7x:2x2x1
jax: 0.10.0
libtpu: 0.0.40
codegen_flags: <defaults>
</compile_context>

<pallas_src>
import jax
import jax.numpy as jnp
from jax.experimental import pallas as pl
from jax.experimental.pallas import tpu as pltpu

HIDDEN = 256
LANE = 128


def _round_up(x, m):
    return ((x + m - 1) // m) * m


def critic_kernel(sT_ref, aT_ref, w1sT_ref, w1aT_ref, b1_ref,
                  w2T_ref, b2_ref, wq_ref, bq_ref, o_ref):
    """One batch tile (tb lanes) of the fused 3-layer MLP, transposed layout.

    Activations are (features, tb): the batch lives on the 128-lane axis, so
    every load/store is lane-dense (unmasked vst) and the q output is packed.
    """
    sT = sT_ref[...].astype(jnp.bfloat16)            # (Ds, tb)  cast in-kernel
    aT = aT_ref[...].astype(jnp.bfloat16)            # (Da, tb)

    # fc1: split-weight matmuls replace cat([state, action]) @ W1 (bf16 in, f32 acc).
    h1 = jnp.dot(w1sT_ref[...], sT, preferred_element_type=jnp.float32)
    h1 = h1 + jnp.dot(w1aT_ref[...], aT, preferred_element_type=jnp.float32)
    h1 = jnp.maximum(h1 + b1_ref[...], 0.0)          # (H, tb) f32, bias bcast over lanes

    # fc2 (bf16 in, f32 acc).
    h2 = jnp.dot(w2T_ref[...], h1.astype(jnp.bfloat16),
                 preferred_element_type=jnp.float32)
    h2 = jnp.maximum(h2 + b2_ref[...], 0.0)          # (H, tb) f32

    # q layer: N=1 output -> f32 VPU multiply + sublane reduction (XLU), no narrow MXU dot.
    q = jnp.sum(h2 * wq_ref[...], axis=0, keepdims=True) + bq_ref[0, 0]   # (1, tb)

    o_ref[...] = q.astype(o_ref.dtype)               # packed, lane-dense store


def _pick_tiling(B):
    """Batch padded to a multiple of 128 lanes; tiles up to 1024 rows; >= 2 tiles
    whenever the batch allows so v7x's two TensorCores both get work."""
    units = _round_up(max(B, 1), LANE) // LANE       # number of 128-row lane groups
    nb = pl.cdiv(units, 8)                           # cap the tile at 8 * 128 = 1024 rows
    if nb == 1 and units >= 2:
        nb = 2                                       # keep megacore busy on v7x
    tb = pl.cdiv(units, nb) * LANE
    return tb, nb


@jax.jit
def critic_forward(state, action, params):
    """state: (B, Ds) f32, action: (B, Da) f32 -> q: (B, 1) f32."""
    w1sT, w1aT, b1, w2T, b2, wq, bq = params         # already kernel-ready dtypes
    B, Ds = state.shape
    Da = action.shape[1]
    H = w2T.shape[0]

    tb, nb = _pick_tiling(B)
    Bp = tb * nb

    # Transpose to batch-in-lanes and pad the lane axis (tiny ops vs. the
    # output-writeback traffic they eliminate).
    sT = jnp.pad(state, ((0, Bp - B), (0, 0))).T     # (Ds, Bp) f32
    aT = jnp.pad(action, ((0, Bp - B), (0, 0))).T    # (Da, Bp) f32

    flops = 2 * Bp * ((Ds + Da) * H + H * H + H)
    bytes_accessed = (
        Bp * (Ds + Da) * 4                           # activations in (f32)
        + ((Ds + Da) * H + H * H) * 2                # weights (bf16, persistent)
        + (3 * H + 1) * 4                            # biases + q column (f32)
        + Bp * 4                                     # packed q output (f32)
    )

    resident = lambda shape: pl.BlockSpec(shape, lambda i: (0, 0))  # VMEM-resident across tiles

    q_row = pl.pallas_call(
        critic_kernel,
        out_shape=jax.ShapeDtypeStruct((1, Bp), jnp.float32),
        grid=(nb,),
        in_specs=[
            pl.BlockSpec((Ds, tb), lambda i: (0, i)),          # state^T tile (lane-dense)
            pl.BlockSpec((Da, tb), lambda i: (0, i)),          # action^T tile (lane-dense)
            resident((H, Ds)),                                 # W1^T (state part), bf16
            resident((H, Da)),                                 # W1^T (action part), bf16
            resident((H, 1)),                                  # b1, f32
            resident((H, H)),                                  # W2^T, bf16
            resident((H, 1)),                                  # b2, f32
            resident((H, 1)),                                  # q weight column, f32
            pl.BlockSpec(memory_space=pltpu.MemorySpace.SMEM), # q bias scalar
        ],
        out_specs=pl.BlockSpec((1, tb), lambda i: (0, i)),     # packed q row
        compiler_params=pltpu.CompilerParams(
            dimension_semantics=("parallel",),
        ),
        cost_estimate=pl.CostEstimate(
            flops=flops, transcendentals=0, bytes_accessed=bytes_accessed),
    )(sT, aT, w1sT, w1aT, b1, w2T, b2, wq, bq)

    return q_row[0, :B, None]


def init_critic_params(key, input_dim, n_actions, hidden=HIDDEN):
    """nn.Linear-style U(-1/sqrt(fan_in), 1/sqrt(fan_in)) init, stored ONCE in
    kernel-ready form: transposed bf16 weights (out, in), f32 biases as (out, 1)
    columns, f32 q weight column, (1, 1) f32 q bias (SMEM scalar).
    Keep separate f32 masters if training is added."""
    d_in = input_dim + n_actions
    keys = jax.random.split(key, 6)

    def linear(kw, kb, fan_in, fan_out):
        bound = 1.0 / float(fan_in) ** 0.5
        w = jax.random.uniform(kw, (fan_in, fan_out), jnp.float32, -bound, bound)
        b = jax.random.uniform(kb, (fan_out,), jnp.float32, -bound, bound)
        return w, b

    w1, b1 = linear(keys[0], keys[1], d_in, hidden)
    w2, b2 = linear(keys[2], keys[3], hidden, hidden)
    wq, bq = linear(keys[4], keys[5], hidden, 1)

    w1sT = w1[:input_dim].T.astype(jnp.bfloat16)     # (hidden, input_dim)
    w1aT = w1[input_dim:].T.astype(jnp.bfloat16)     # (hidden, n_actions)
    w2T = w2.T.astype(jnp.bfloat16)                  # (hidden, hidden)
    b1c = b1.reshape(hidden, 1).astype(jnp.float32)
    b2c = b2.reshape(hidden, 1).astype(jnp.float32)
    wqc = wq.reshape(hidden, 1).astype(jnp.float32)  # q weight column (kept f32)
    bqc = bq.reshape(1, 1).astype(jnp.float32)
    return (w1sT, w1aT, b1c, w2T, b2c, wqc, bqc)

# TODO(synk): torch.optim.Adam / training step has no forward-pass equivalent and is not ported.


if __name__ == "__main__":
    key = jax.random.PRNGKey(0)
    k_state, k_action, k_params = jax.random.split(key, 3)

    batch = 2
    input_dim = 16
    n_actions = 4

    state = jax.random.normal(k_state, (batch, input_dim), jnp.float32)
    action = jax.random.normal(k_action, (batch, n_actions), jnp.float32)
    params = init_critic_params(k_params, input_dim, n_actions)

    q = critic_forward(state, action, params)
    q = jax.block_until_ready(q)

    # Pure-JAX reference using the same bf16-input / f32-accumulate math as the kernel.
    w1sT, w1aT, b1c, w2T, b2c, wqc, bqc = params
    sT = state.T.astype(jnp.bfloat16)
    aT = action.T.astype(jnp.bfloat16)
    h1 = jnp.maximum(
        jnp.dot(w1sT, sT, preferred_element_type=jnp.float32)
        + jnp.dot(w1aT, aT, preferred_element_type=jnp.float32) + b1c, 0.0)
    h2 = jnp.maximum(
        jnp.dot(w2T, h1.astype(jnp.bfloat16), preferred_element_type=jnp.float32) + b2c,
        0.0)
    ref = (jnp.sum(h2 * wqc, axis=0, keepdims=True) + bqc[0, 0]).T   # (batch, 1)

    assert q.shape == (batch, 1), q.shape
    assert jnp.allclose(q, ref, atol=1e-2, rtol=1e-2), (q, ref)

    print("KERNEL_OK")
</pallas_src>

<mosaic_0001>
module attributes {stable_mosaic.version = 11 : i64} {
  func.func @critic_kernel(%arg0: i32, %arg1: memref<16x128xf32, #tpu.memory_space<vmem>>, %arg2: memref<4x128xf32, #tpu.memory_space<vmem>>, %arg3: memref<256x16xbf16, #tpu.memory_space<vmem>>, %arg4: memref<256x4xbf16, #tpu.memory_space<vmem>>, %arg5: memref<256x1xf32, #tpu.memory_space<vmem>>, %arg6: memref<256x256xbf16, #tpu.memory_space<vmem>>, %arg7: memref<256x1xf32, #tpu.memory_space<vmem>>, %arg8: memref<256x1xf32, #tpu.memory_space<vmem>>, %arg9: memref<1x1xf32, #tpu.memory_space<smem>>, %arg10: memref<1x128xf32, #tpu.memory_space<vmem>>) attributes {dimension_semantics = [#tpu.dimension_semantics<parallel>], iteration_bounds = array<i64: 1>, scalar_prefetch = 0 : i64, scratch_operands = 0 : i64, tpu.core_type = #tpu.core_type<tc>, window_params = [{transform_indices = @transform_0, window_bounds = array<i64: 16, 128>}, {transform_indices = @transform_1, window_bounds = array<i64: 4, 128>}, {pipeline_mode = #tpu.pipeline_mode<synchronous>, transform_indices = @transform_2, window_bounds = array<i64: 256, 16>}, {pipeline_mode = #tpu.pipeline_mode<synchronous>, transform_indices = @transform_3, window_bounds = array<i64: 256, 4>}, {pipeline_mode = #tpu.pipeline_mode<synchronous>, transform_indices = @transform_4, window_bounds = array<i64: 256, 1>}, {pipeline_mode = #tpu.pipeline_mode<synchronous>, transform_indices = @transform_5, window_bounds = array<i64: 256, 256>}, {pipeline_mode = #tpu.pipeline_mode<synchronous>, transform_indices = @transform_6, window_bounds = array<i64: 256, 1>}, {pipeline_mode = #tpu.pipeline_mode<synchronous>, transform_indices = @transform_7, window_bounds = array<i64: 256, 1>}, {transform_indices = @transform_8, window_bounds = array<i64: 1, 1>}, {transform_indices = @transform_9, window_bounds = array<i64: 1, 128>}]} {
    %c0 = arith.constant 0 : index
    %c0_0 = arith.constant 0 : index
    %0 = vector.load %arg1[%c0, %c0_0] : memref<16x128xf32, #tpu.memory_space<vmem>>, vector<16x128xf32>
    %1 = arith.truncf %0 : vector<16x128xf32> to vector<16x128xbf16>
    %c0_1 = arith.constant 0 : index
    %c0_2 = arith.constant 0 : index
    %2 = vector.load %arg2[%c0_1, %c0_2] : memref<4x128xf32, #tpu.memory_space<vmem>>, vector<4x128xf32>
    %3 = arith.truncf %2 : vector<4x128xf32> to vector<4x128xbf16>
    %c0_3 = arith.constant 0 : index
    %c0_4 = arith.constant 0 : index
    %4 = vector.load %arg3[%c0_3, %c0_4] : memref<256x16xbf16, #tpu.memory_space<vmem>>, vector<256x16xbf16>
    %cst = arith.constant dense<0.000000e+00> : vector<256x128xf32>
    %5 = tpu.matmul %4, %1, %cst {dimension_numbers = #tpu.dot_dimension_numbers<[1], [0], [0], [1], [0, 0, 1, 1], [], []>} : vector<256x16xbf16>, vector<16x128xbf16>, vector<256x128xf32> -> vector<256x128xf32>
    %c0_5 = arith.constant 0 : index
    %c0_6 = arith.constant 0 : index
    %6 = vector.load %arg4[%c0_5, %c0_6] : memref<256x4xbf16, #tpu.memory_space<vmem>>, vector<256x4xbf16>
    %cst_7 = arith.constant dense<0.000000e+00> : vector<256x128xf32>
    %7 = tpu.matmul %6, %3, %cst_7 {dimension_numbers = #tpu.dot_dimension_numbers<[1], [0], [0], [1], [0, 0, 1, 1], [], []>} : vector<256x4xbf16>, vector<4x128xbf16>, vector<256x128xf32> -> vector<256x128xf32>
    %8 = arith.addf %5, %7 : vector<256x128xf32>
    %c0_8 = arith.constant 0 : index
    %c0_9 = arith.constant 0 : index
    %9 = vector.load %arg5[%c0_8, %c0_9] : memref<256x1xf32, #tpu.memory_space<vmem>>, vector<256x1xf32>
    %10 = vector.broadcast %9 : vector<256x1xf32> to vector<256x128xf32>
    %11 = arith.addf %8, %10 : vector<256x128xf32>
    %cst_10 = arith.constant 0.000000e+00 : f32
    %12 = vector.broadcast %cst_10 : f32 to vector<256x128xf32>
    %13 = arith.maximumf %11, %12 : vector<256x128xf32>
    %c0_11 = arith.constant 0 : index
    %c0_12 = arith.constant 0 : index
    %14 = vector.load %arg6[%c0_11, %c0_12] : memref<256x256xbf16, #tpu.memory_space<vmem>>, vector<256x256xbf16>
    %15 = arith.truncf %13 : vector<256x128xf32> to vector<256x128xbf16>
    %cst_13 = arith.constant dense<0.000000e+00> : vector<256x128xf32>
    %16 = tpu.matmul %14, %15, %cst_13 {dimension_numbers = #tpu.dot_dimension_numbers<[1], [0], [0], [1], [0, 0, 1, 1], [], []>} : vector<256x256xbf16>, vector<256x128xbf16>, vector<256x128xf32> -> vector<256x128xf32>
    %c0_14 = arith.constant 0 : index
    %c0_15 = arith.constant 0 : index
    %17 = vector.load %arg7[%c0_14, %c0_15] : memref<256x1xf32, #tpu.memory_space<vmem>>, vector<256x1xf32>
    %18 = vector.broadcast %17 : vector<256x1xf32> to vector<256x128xf32>
    %19 = arith.addf %16, %18 : vector<256x128xf32>
    %cst_16 = arith.constant 0.000000e+00 : f32
    %20 = vector.broadcast %cst_16 : f32 to vector<256x128xf32>
    %21 = arith.maximumf %19, %20 : vector<256x128xf32>
    %c0_17 = arith.constant 0 : index
    %c0_18 = arith.constant 0 : index
    %22 = vector.load %arg8[%c0_17, %c0_18] : memref<256x1xf32, #tpu.memory_space<vmem>>, vector<256x1xf32>
    %23 = vector.broadcast %22 : vector<256x1xf32> to vector<256x128xf32>
    %24 = arith.mulf %21, %23 : vector<256x128xf32>
    %cst_19 = arith.constant dense<0.000000e+00> : vector<128xf32>
    %25 = vector.multi_reduction <add>, %24, %cst_19 [0] : vector<256x128xf32> to vector<128xf32>
    %26 = vector.shape_cast %25 : vector<128xf32> to vector<1x128xf32>
    %c0_20 = arith.constant 0 : index
    %c0_21 = arith.constant 0 : index
    %27 = memref.load %arg9[%c0_20, %c0_21] : memref<1x1xf32, #tpu.memory_space<smem>>
    %28 = vector.broadcast %27 : f32 to vector<1x128xf32>
    %29 = arith.addf %26, %28 : vector<1x128xf32>
    %c0_22 = arith.constant 0 : index
    %c0_23 = arith.constant 0 : index
    %30 = vector.load %arg10[%c0_22, %c0_23] : memref<1x128xf32, #tpu.memory_space<vmem>>, vector<1x128xf32>
    tpu.vector_store %arg10[%c0_22, %c0_23], %29 {strides = array<i32>} : memref<1x128xf32, #tpu.memory_space<vmem>>, vector<1x128xf32>,
    return
  }
  func.func @transform_0(%arg0: i32) -> (i32, i32) {
    %c0_i32 = arith.constant 0 : i32
    %c0_i32_0 = arith.constant 0 : i32
    return %c0_i32, %arg0 : i32, i32
  }
  func.func @transform_1(%arg0: i32) -> (i32, i32) {
    %c0_i32 = arith.constant 0 : i32
    %c0_i32_0 = arith.constant 0 : i32
    return %c0_i32, %arg0 : i32, i32
  }
  func.func @transform_2(%arg0: i32) -> (i32, i32) {
    %c0_i32 = arith.constant 0 : i32
    %c0_i32_0 = arith.constant 0 : i32
    %c0_i32_1 = arith.constant 0 : i32
    return %c0_i32, %c0_i32_0 : i32, i32
  }
  func.func @transform_3(%arg0: i32) -> (i32, i32) {
    %c0_i32 = arith.constant 0 : i32
    %c0_i32_0 = arith.constant 0 : i32
    %c0_i32_1 = arith.constant 0 : i32
    return %c0_i32, %c0_i32_0 : i32, i32
  }
  func.func @transform_4(%arg0: i32) -> (i32, i32) {
    %c0_i32 = arith.constant 0 : i32
    %c0_i32_0 = arith.constant 0 : i32
    %c0_i32_1 = arith.constant 0 : i32
    return %c0_i32, %c0_i32_0 : i32, i32
  }
  func.func @transform_5(%arg0: i32) -> (i32, i32) {
    %c0_i32 = arith.constant 0 : i32
    %c0_i32_0 = arith.constant 0 : i32
    %c0_i32_1 = arith.constant 0 : i32
    return %c0_i32, %c0_i32_0 : i32, i32
  }
  func.func @transform_6(%arg0: i32) -> (i32, i32) {
    %c0_i32 = arith.constant 0 : i32
    %c0_i32_0 = arith.constant 0 : i32
    %c0_i32_1 = arith.constant 0 : i32
    return %c0_i32, %c0_i32_0 : i32, i32
  }
  func.func @transform_7(%arg0: i32) -> (i32, i32) {
    %c0_i32 = arith.constant 0 : i32
    %c0_i32_0 = arith.constant 0 : i32
    %c0_i32_1 = arith.constant 0 : i32
    return %c0_i32, %c0_i32_0 : i32, i32
  }
  func.func @transform_8(%arg0: i32) -> (i32, i32) {
    %c0_i32 = arith.constant 0 : i32
    %c0_i32_0 = arith.constant 0 : i32
    %c0_i32_1 = arith.constant 0 : i32
    return %c0_i32, %c0_i32_0 : i32, i32
  }
  func.func @transform_9(%arg0: i32) -> (i32, i32) {
    %c0_i32 = arith.constant 0 : i32
    %c0_i32_0 = arith.constant 0 : i32
    return %c0_i32, %arg0 : i32, i32
  }
}

</mosaic_0001>

<llo_original>
// kernel: critic_forward.1
$region0: #{critic_forward.1}
  #allocation0 [shape = 'u32[]', space=smem, size = 0x4, offset = 0x4, fixed_abs, tag = 'smem constant byte address 0x4 - core index']
  #allocation1 [shape = 'u32[144,128]{1,0:T(1,128)}', space=vmem, size = 0x12000, scoped, tag = 'internal scratch']
  #allocation2 [shape = 'f32[1,1]{1,0:T(1,128)S(6)}', space=smem, size = 0x200, scoped, tag = 'scoped memory for critic_forward.1']
  %s0 = inlined_call_operand.vmem [shape: f32[16,128], index: 0, kind: input, shape index: {}]
  %s1 = inlined_call_operand.vmem [shape: f32[4,128], index: 1, kind: input, shape index: {}]
  %s2 = inlined_call_operand.vmem [shape: bf16[256,16], index: 2, kind: input, shape index: {}]
  %s3 = inlined_call_operand.vmem [shape: bf16[256,4], index: 3, kind: input, shape index: {}]
  %s4 = inlined_call_operand.vmem [shape: f32[256,1], index: 4, kind: input, shape index: {}]
  %s5 = inlined_call_operand.vmem [shape: bf16[256,256], index: 5, kind: input, shape index: {}]
  %s6 = inlined_call_operand.vmem [shape: f32[256,1], index: 6, kind: input, shape index: {}]
  %s7 = inlined_call_operand.vmem [shape: f32[256,1], index: 7, kind: input, shape index: {}]
  %s8 = inlined_call_operand.<no memory space> [shape: f32[1,1], index: 8, kind: input, shape index: {}]
  %s9 = inlined_call_operand.vmem [shape: f32[1,128], index: 9, kind: output, shape index: {}]
  %s10 = sld [smem:[#allocation0]]
  $region46: #{critic_forward.1} parent=0
    _
  %s12 = ssub.s32 1, %s10
  %s13 = scalar_select 0, %s12, %s10
  %14 = sst [smem:[#allocation2]] %s8
  // Predicated region
  $region2: #{critic_forward.1} parent=0 // pred_check
    _
  $region3: #{critic_forward.1} parent=0 // pred_check_branch
    %16 = sbr.rel (0) target = $region5
  $region4: #{critic_forward.1} parent=0 // pred_region
    _
  $region5: #{critic_forward.1} parent=0 // pred_fallthru
    _
  // Predicated region
  $region6: #{critic_forward.1} parent=0 // pred_check
    _
  $region7: #{critic_forward.1} parent=0 // pred_check_branch
    %18 = sbr.rel (0) target = $region9
  $region8: #{critic_forward.1} parent=0 // pred_region
    _
  $region9: #{critic_forward.1} parent=0 // pred_fallthru
    _
  // Predicated region
  $region10: #{critic_forward.1} parent=0 // pred_check
    _
  $region11: #{critic_forward.1} parent=0 // pred_check_branch
    %20 = sbr.rel (0) target = $region13
  $region12: #{critic_forward.1} parent=0 // pred_region
    _
  $region13: #{critic_forward.1} parent=0 // pred_fallthru
    _
  // Predicated region
  $region14: #{critic_forward.1} parent=0 // pred_check
    _
  $region15: #{critic_forward.1} parent=0 // pred_check_branch
    %22 = sbr.rel (0) target = $region17
  $region16: #{critic_forward.1} parent=0 // pred_region
    _
  $region17: #{critic_forward.1} parent=0 // pred_fallthru
    _
  // Predicated region
  $region18: #{critic_forward.1} parent=0 // pred_check
    _
  $region19: #{critic_forward.1} parent=0 // pred_check_branch
    %24 = sbr.rel (0) target = $region21
  $region20: #{critic_forward.1} parent=0 // pred_region
    _
  $region21: #{critic_forward.1} parent=0 // pred_fallthru
    _
  // Predicated region
  $region22: #{critic_forward.1} parent=0 // pred_check
    _
  $region23: #{critic_forward.1} parent=0 // pred_check_branch
    %26 = sbr.rel (0) target = $region25
  $region24: #{critic_forward.1} parent=0 // pred_region
    _
  $region25: #{critic_forward.1} parent=0 // pred_fallthru
    _
  // Predicated region
  $region26: #{critic_forward.1} parent=0 // pred_check
    _
  $region27: #{critic_forward.1} parent=0 // pred_check_branch
    %28 = sbr.rel (0) target = $region29
  $region28: #{critic_forward.1} parent=0 // pred_region
    _
  $region29: #{critic_forward.1} parent=0 // pred_fallthru
    _
  // Predicated region
  $region30: #{critic_forward.1} parent=0 // pred_check
    _
  $region31: #{critic_forward.1} parent=0 // pred_check_branch
    %30 = sbr.rel (0) target = $region33
  $region32: #{critic_forward.1} parent=0 // pred_region
    _
  $region33: #{critic_forward.1} parent=0 // pred_fallthru
    _
  // Predicated region
  $region34: #{critic_forward.1} parent=0 // pred_check
    _
  $region35: #{critic_forward.1} parent=0 // pred_check_branch
    %32 = sbr.rel (0) target = $region37
  $region36: #{critic_forward.1} parent=0 // pred_region
    _
  $region37: #{critic_forward.1} parent=0 // pred_fallthru
    _
  %v34 = vld [vmem:[%s0] sm:$0xff]
  %v35 = vld [vmem:[%s0 + $0x8] sm:$0xff]
  %v36 = vpack.c.bf16 %v35, %v34
  %v37 = vld [vmem:[%s1] sm:$0xf]
  %v38 = vpack.c.bf16 %v37, %v37
  %v39 = vld [vmem:[%s2] sm:$0xf]
  %v40 = vld [vmem:[%s2 + $0x4] sm:$0xf]
  %v41 = vld [vmem:[%s2 + $0x8] sm:$0xf]
  %v42 = vld [vmem:[%s2 + $0xc] sm:$0xf]
  %v43 = vld [vmem:[%s2 + $0x10] sm:$0xf]
  %v44 = vld [vmem:[%s2 + $0x14] sm:$0xf]
  %v45 = vld [vmem:[%s2 + $0x18] sm:$0xf]
  %v46 = vld [vmem:[%s2 + $0x1c] sm:$0xf]
  %v47 = vld [vmem:[%s2 + $0x20] sm:$0xf]
  %v48 = vld [vmem:[%s2 + $0x24] sm:$0xf]
  %v49 = vld [vmem:[%s2 + $0x28] sm:$0xf]
  %v50 = vld [vmem:[%s2 + $0x2c] sm:$0xf]
  %v51 = vld [vmem:[%s2 + $0x30] sm:$0xf]
  %v52 = vld [vmem:[%s2 + $0x34] sm:$0xf]
  %v53 = vld [vmem:[%s2 + $0x38] sm:$0xf]
  %v54 = vld [vmem:[%s2 + $0x3c] sm:$0xf]
  %v55 = vld [vmem:[%s2 + $0x40] sm:$0xf]
  %v56 = vld [vmem:[%s2 + $0x44] sm:$0xf]
  %v57 = vld [vmem:[%s2 + $0x48] sm:$0xf]
  %v58 = vld [vmem:[%s2 + $0x4c] sm:$0xf]
  %v59 = vld [vmem:[%s2 + $0x50] sm:$0xf]
  %v60 = vld [vmem:[%s2 + $0x54] sm:$0xf]
  %v61 = vld [vmem:[%s2 + $0x58] sm:$0xf]
  %v62 = vld [vmem:[%s2 + $0x5c] sm:$0xf]
  %v63 = vld [vmem:[%s2 + $0x60] sm:$0xf]
  %v64 = vld [vmem:[%s2 + $0x64] sm:$0xf]
  %v65 = vld [vmem:[%s2 + $0x68] sm:$0xf]
  %v66 = vld [vmem:[%s2 + $0x6c] sm:$0xf]
  %v67 = vld [vmem:[%s2 + $0x70] sm:$0xf]
  %v68 = vld [vmem:[%s2 + $0x74] sm:$0xf]
  %v69 = vld [vmem:[%s2 + $0x78] sm:$0xf]
  %v70 = vld [vmem:[%s2 + $0x7c] sm:$0xf]
  %v71 = vld [vmem:[%s3] sm:$0xf]
  %v72 = vld [vmem:[%s3 + $0x4] sm:$0xf]
  %v73 = vld [vmem:[%s3 + $0x8] sm:$0xf]
  %v74 = vld [vmem:[%s3 + $0xc] sm:$0xf]
  %v75 = vld [vmem:[%s3 + $0x10] sm:$0xf]
  %v76 = vld [vmem:[%s3 + $0x14] sm:$0xf]
  %v77 = vld [vmem:[%s3 + $0x18] sm:$0xf]
  %v78 = vld [vmem:[%s3 + $0x1c] sm:$0xf]
  %v79 = vld [vmem:[%s3 + $0x20] sm:$0xf]
  %v80 = vld [vmem:[%s3 + $0x24] sm:$0xf]
  %v81 = vld [vmem:[%s3 + $0x28] sm:$0xf]
  %v82 = vld [vmem:[%s3 + $0x2c] sm:$0xf]
  %v83 = vld [vmem:[%s3 + $0x30] sm:$0xf]
  %v84 = vld [vmem:[%s3 + $0x34] sm:$0xf]
  %v85 = vld [vmem:[%s3 + $0x38] sm:$0xf]
  %v86 = vld [vmem:[%s3 + $0x3c] sm:$0xf]
  %v87 = vld [vmem:[%s3 + $0x40] sm:$0xf]
  %v88 = vld [vmem:[%s3 + $0x44] sm:$0xf]
  %v89 = vld [vmem:[%s3 + $0x48] sm:$0xf]
  %v90 = vld [vmem:[%s3 + $0x4c] sm:$0xf]
  %v91 = vld [vmem:[%s3 + $0x50] sm:$0xf]
  %v92 = vld [vmem:[%s3 + $0x54] sm:$0xf]
  %v93 = vld [vmem:[%s3 + $0x58] sm:$0xf]
  %v94 = vld [vmem:[%s3 + $0x5c] sm:$0xf]
  %v95 = vld [vmem:[%s3 + $0x60] sm:$0xf]
  %v96 = vld [vmem:[%s3 + $0x64] sm:$0xf]
  %v97 = vld [vmem:[%s3 + $0x68] sm:$0xf]
  %v98 = vld [vmem:[%s3 + $0x6c] sm:$0xf]
  %v99 = vld [vmem:[%s3 + $0x70] sm:$0xf]
  %v100 = vld [vmem:[%s3 + $0x74] sm:$0xf]
  %v101 = vld [vmem:[%s3 + $0x78] sm:$0xf]
  %v102 = vld [vmem:[%s3 + $0x7c] sm:$0xf]
  %v135 = vunpack.c.l.b16 %v71
  %v136 = vunpack.c.l.b16 %v72
  %v137 = vunpack.c.l.b16 %v73
  %v138 = vunpack.c.l.b16 %v74
  %v139 = vunpack.c.l.b16 %v75
  %v140 = vunpack.c.l.b16 %v76
  %v141 = vunpack.c.l.b16 %v77
  %v142 = vunpack.c.l.b16 %v78
  %v143 = vunpack.c.l.b16 %v79
  %v144 = vunpack.c.l.b16 %v80
  %v145 = vunpack.c.l.b16 %v81
  %v146 = vunpack.c.l.b16 %v82
  %v147 = vunpack.c.l.b16 %v83
  %v148 = vunpack.c.l.b16 %v84
  %v149 = vunpack.c.l.b16 %v85
  %v150 = vunpack.c.l.b16 %v86
  %v151 = vunpack.c.l.b16 %v87
  %v152 = vunpack.c.l.b16 %v88
  %v153 = vunpack.c.l.b16 %v89
  %v154 = vunpack.c.l.b16 %v90
  %v155 = vunpack.c.l.b16 %v91
  %v156 = vunpack.c.l.b16 %v92
  %v157 = vunpack.c.l.b16 %v93
  %v158 = vunpack.c.l.b16 %v94
  %v159 = vunpack.c.l.b16 %v95
  %v160 = vunpack.c.l.b16 %v96
  %v161 = vunpack.c.l.b16 %v97
  %v162 = vunpack.c.l.b16 %v98
  %v163 = vunpack.c.l.b16 %v99
  %v164 = vunpack.c.l.b16 %v100
  %v165 = vunpack.c.l.b16 %v101
  %v166 = vunpack.c.l.b16 %v102
  %v167 = vpack.c.b16 %v136, %v135
  %v168 = vpack.c.b16 %v138, %v137
  %v169 = vpack.c.b16 %v140, %v139
  %v170 = vpack.c.b16 %v142, %v141
  %v171 = vpack.c.b16 %v144, %v143
  %v172 = vpack.c.b16 %v146, %v145
  %v173 = vpack.c.b16 %v148, %v147
  %v174 = vpack.c.b16 %v150, %v149
  %v175 = vpack.c.b16 %v152, %v151
  %v176 = vpack.c.b16 %v154, %v153
  %v177 = vpack.c.b16 %v156, %v155
  %v178 = vpack.c.b16 %v158, %v157
  %v179 = vpack.c.b16 %v160, %v159
  %v180 = vpack.c.b16 %v162, %v161
  %v181 = vpack.c.b16 %v164, %v163
  %v182 = vpack.c.b16 %v166, %v165
  %vm183 = vcmask 31744
  %v185 = vsel %vm183, %v167, 0
  %v188 = vsel %vm183, %v168, 0
  %v191 = vsel %vm183, %v169, 0
  %v194 = vsel %vm183, %v170, 0
  %v197 = vsel %vm183, %v171, 0
  %v200 = vsel %vm183, %v172, 0
  %v203 = vsel %vm183, %v173, 0
  %v206 = vsel %vm183, %v174, 0
  %v209 = vsel %vm183, %v175, 0
  %v212 = vsel %vm183, %v176, 0
  %v215 = vsel %vm183, %v177, 0
  %v218 = vsel %vm183, %v178, 0
  %v221 = vsel %vm183, %v179, 0
  %v224 = vsel %vm183, %v180, 0
  %v227 = vsel %vm183, %v181, 0
  %v230 = vsel %vm183, %v182, 0
  %vm232 = vcmask 1041408
  %v234 = vsel %vm232, %v38, 0
  %236 = vmatprep.subr.bf16.mxu0 0
  %237 = vmatpush1.bf16.msra.mxu0 %v234
  %238 = vmatprep.subr.bf16.mxu0 0
  %239 = vmatpush1.bf16.msra.mxu0 0
  %240 = vmatprep.subr.bf16.mxu0 0
  %241 = vmatpush1.bf16.msra.mxu0 0
  %242 = vmatprep.subr.bf16.mxu0 0
  %243 = vmatpush1.bf16.msra.mxu0 0
  %244 = vmatprep.subr.bf16.mxu0 0
  %245 = vmatpush1.bf16.msra.mxu0 0
  %246 = vmatprep.subr.bf16.mxu0 0
  %247 = vmatpush1.bf16.msra.mxu0 0
  %248 = vmatprep.subr.bf16.mxu0 0
  %249 = vmatpush1.bf16.msra.mxu0 0
  %250 = vmatprep.subr.bf16.mxu0 0
  %251 = vmatpush1.bf16.msra.mxu0 0
  %252 = vmatprep.subr.bf16.mxu0 0
  %253 = vmatpush1.bf16.msra.mxu0 0
  %254 = vmatprep.subr.bf16.mxu0 0
  %255 = vmatpush1.bf16.msra.mxu0 0
  %256 = vmatprep.subr.bf16.mxu0 0
  %257 = vmatpush1.bf16.msra.mxu0 0
  %258 = vmatprep.subr.bf16.mxu0 0
  %259 = vmatpush1.bf16.msra.mxu0 0
  %260 = vmatprep.subr.bf16.mxu0 0
  %261 = vmatpush1.bf16.msra.mxu0 0
  %262 = vmatprep.subr.bf16.mxu0 0
  %263 = vmatpush1.bf16.msra.mxu0 0
  %264 = vmatprep.subr.bf16.mxu0 0
  %265 = vmatpush1.bf16.msra.mxu0 0
  %266 = vmatprep.subr.bf16.mxu0 0
  %267 = vmatpush1.bf16.msra.mxu0 0
  %268 = vmatprep.mubr.bf16.mxu0 0
  %269 = vmatmul.mubr.bf16.gmra.mrb[0].mxu0 %v185
  %v270 = vpop.f32.mrb[0].mxu0
  %v271 = vadd.f32 0.0, %v270
  %v272 = vpop.f32.mrb[0].mxu0
  %v273 = vpop.f32.mrb[0].mxu0
  %v274 = vadd.f32 0.0, %v273
  %v275 = vpop.f32.mrb[0].mxu0
  %276 = vmatprep.mubr.bf16.mxu0 0
  %277 = vmatmul.mubr.bf16.gmra.mrb[0].mxu0 %v188
  %v278 = vpop.f32.mrb[0].mxu0
  %v279 = vadd.f32 0.0, %v278
  %v280 = vpop.f32.mrb[0].mxu0
  %v281 = vpop.f32.mrb[0].mxu0
  %v282 = vadd.f32 0.0, %v281
  %v283 = vpop.f32.mrb[0].mxu0
  %284 = vmatprep.mubr.bf16.mxu0 0
  %285 = vmatmul.mubr.bf16.gmra.mrb[0].mxu0 %v191
  %v286 = vpop.f32.mrb[0].mxu0
  %v287 = vadd.f32 0.0, %v286
  %v288 = vpop.f32.mrb[0].mxu0
  %v289 = vpop.f32.mrb[0].mxu0
  %v290 = vadd.f32 0.0, %v289
  %v291 = vpop.f32.mrb[0].mxu0
  %292 = vmatprep.mubr.bf16.mxu0 0
  %293 = vmatmul.mubr.bf16.gmra.mrb[0].mxu0 %v194
  %v294 = vpop.f32.mrb[0].mxu0
  %v295 = vadd.f32 0.0, %v294
  %v296 = vpop.f32.mrb[0].mxu0
  %v297 = vpop.f32.mrb[0].mxu0
  %v298 = vadd.f32 0.0, %v297
  %v299 = vpop.f32.mrb[0].mxu0
  %300 = vmatprep.mubr.bf16.mxu0 0
  %301 = vmatmul.mubr.bf16.gmra.mrb[0].mxu0 %v197
  %v302 = vpop.f32.mrb[0].mxu0
  %v303 = vadd.f32 0.0, %v302
  %v304 = vpop.f32.mrb[0].mxu0
  %v305 = vpop.f32.mrb[0].mxu0
  %v306 = vadd.f32 0.0, %v305
  %v307 = vpop.f32.mrb[0].mxu0
  %308 = vmatprep.mubr.bf16.mxu0 0
  %309 = vmatmul.mubr.bf16.gmra.mrb[0].mxu0 %v200
  %v310 = vpop.f32.mrb[0].mxu0
  %v311 = vadd.f32 0.0, %v310
  %v312 = vpop.f32.mrb[0].mxu0
  %v313 = vpop.f32.mrb[0].mxu0
  %v314 = vadd.f32 0.0, %v313
  %v315 = vpop.f32.mrb[0].mxu0
  %316 = vmatprep.mubr.bf16.mxu0 0
  %317 = vmatmul.mubr.bf16.gmra.mrb[0].mxu0 %v203
  %v318 = vpop.f32.mrb[0].mxu0
  %v319 = vadd.f32 0.0, %v318
  %v320 = vpop.f32.mrb[0].mxu0
  %v321 = vpop.f32.mrb[0].mxu0
  %v322 = vadd.f32 0.0, %v321
  %v323 = vpop.f32.mrb[0].mxu0
  %324 = vmatprep.mubr.bf16.mxu0 0
  %325 = vmatmul.mubr.bf16.gmra.mrb[0].mxu0 %v206
  %v326 = vpop.f32.mrb[0].mxu0
  %v327 = vadd.f32 0.0, %v326
  %v328 = vpop.f32.mrb[0].mxu0
  %v329 = vpop.f32.mrb[0].mxu0
  %v330 = vadd.f32 0.0, %v329
  %v331 = vpop.f32.mrb[0].mxu0
  %332 = vmatprep.mubr.bf16.mxu0 0
  %333 = vmatmul.mubr.bf16.gmra.mrb[0].mxu0 %v209
  %v334 = vpop.f32.mrb[0].mxu0
  %v335 = vadd.f32 0.0, %v334
  %v336 = vpop.f32.mrb[0].mxu0
  %v337 = vpop.f32.mrb[0].mxu0
  %v338 = vadd.f32 0.0, %v337
  %v339 = vpop.f32.mrb[0].mxu0
  %340 = vmatprep.mubr.bf16.mxu0 0
  %341 = vmatmul.mubr.bf16.gmra.mrb[0].mxu0 %v212
  %v342 = vpop.f32.mrb[0].mxu0
  %v343 = vadd.f32 0.0, %v342
  %v344 = vpop.f32.mrb[0].mxu0
  %v345 = vpop.f32.mrb[0].mxu0
  %v346 = vadd.f32 0.0, %v345
  %v347 = vpop.f32.mrb[0].mxu0
  %348 = vmatprep.mubr.bf16.mxu0 0
  %349 = vmatmul.mubr.bf16.gmra.mrb[0].mxu0 %v215
  %v350 = vpop.f32.mrb[0].mxu0
  %v351 = vadd.f32 0.0, %v350
  %v352 = vpop.f32.mrb[0].mxu0
  %v353 = vpop.f32.mrb[0].mxu0
  %v354 = vadd.f32 0.0, %v353
  %v355 = vpop.f32.mrb[0].mxu0
  %356 = vmatprep.mubr.bf16.mxu0 0
  %357 = vmatmul.mubr.bf16.gmra.mrb[0].mxu0 %v218
  %v358 = vpop.f32.mrb[0].mxu0
  %v359 = vadd.f32 0.0, %v358
  %v360 = vpop.f32.mrb[0].mxu0
  %v361 = vpop.f32.mrb[0].mxu0
  %v362 = vadd.f32 0.0, %v361
  %v363 = vpop.f32.mrb[0].mxu0
  %364 = vmatprep.mubr.bf16.mxu0 0
  %365 = vmatmul.mubr.bf16.gmra.mrb[0].mxu0 %v221
  %v366 = vpop.f32.mrb[0].mxu0
  %v367 = vadd.f32 0.0, %v366
  %v368 = vpop.f32.mrb[0].mxu0
  %v369 = vpop.f32.mrb[0].mxu0
  %v370 = vadd.f32 0.0, %v369
  %v371 = vpop.f32.mrb[0].mxu0
  %372 = vmatprep.mubr.bf16.mxu0 0
  %373 = vmatmul.mubr.bf16.gmra.mrb[0].mxu0 %v224
  %v374 = vpop.f32.mrb[0].mxu0
  %v375 = vadd.f32 0.0, %v374
  %v376 = vpop.f32.mrb[0].mxu0
  %v377 = vpop.f32.mrb[0].mxu0
  %v378 = vadd.f32 0.0, %v377
  %v379 = vpop.f32.mrb[0].mxu0
  %380 = vmatprep.mubr.bf16.mxu0 0
  %381 = vmatmul.mubr.bf16.gmra.mrb[0].mxu0 %v227
  %v382 = vpop.f32.mrb[0].mxu0
  %v383 = vadd.f32 0.0, %v382
  %v384 = vpop.f32.mrb[0].mxu0
  %v385 = vpop.f32.mrb[0].mxu0
  %v386 = vadd.f32 0.0, %v385
  %v387 = vpop.f32.mrb[0].mxu0
  %388 = vmatprep.mubr.bf16.mxu0 0
  %389 = vmatmul.mubr.bf16.gmra.mrb[0].mxu0 %v230
  %v390 = vpop.f32.mrb[0].mxu0
  %v391 = vadd.f32 0.0, %v390
  %v392 = vpop.f32.mrb[0].mxu0
  %v393 = vpop.f32.mrb[0].mxu0
  %v394 = vadd.f32 0.0, %v393
  %v395 = vpop.f32.mrb[0].mxu0
  %396 = vdwg.mxu0
  %v429 = vunpack.c.l.b16 %v39
  %v430 = vunpack.c.l.b16 %v40
  %v431 = vunpack.c.l.b16 %v41
  %v432 = vunpack.c.l.b16 %v42
  %v433 = vunpack.c.l.b16 %v43
  %v434 = vunpack.c.l.b16 %v44
  %v435 = vunpack.c.l.b16 %v45
  %v436 = vunpack.c.l.b16 %v46
  %v437 = vunpack.c.l.b16 %v47
  %v438 = vunpack.c.l.b16 %v48
  %v439 = vunpack.c.l.b16 %v49
  %v440 = vunpack.c.l.b16 %v50
  %v441 = vunpack.c.l.b16 %v51
  %v442 = vunpack.c.l.b16 %v52
  %v443 = vunpack.c.l.b16 %v53
  %v444 = vunpack.c.l.b16 %v54
  %v445 = vunpack.c.l.b16 %v55
  %v446 = vunpack.c.l.b16 %v56
  %v447 = vunpack.c.l.b16 %v57
  %v448 = vunpack.c.l.b16 %v58
  %v449 = vunpack.c.l.b16 %v59
  %v450 = vunpack.c.l.b16 %v60
  %v451 = vunpack.c.l.b16 %v61
  %v452 = vunpack.c.l.b16 %v62
  %v453 = vunpack.c.l.b16 %v63
  %v454 = vunpack.c.l.b16 %v64
  %v455 = vunpack.c.l.b16 %v65
  %v456 = vunpack.c.l.b16 %v66
  %v457 = vunpack.c.l.b16 %v67
  %v458 = vunpack.c.l.b16 %v68
  %v459 = vunpack.c.l.b16 %v69
  %v460 = vunpack.c.l.b16 %v70
  %v461 = vpack.c.b16 %v430, %v429
  %v462 = vpack.c.b16 %v432, %v431
  %v463 = vpack.c.b16 %v434, %v433
  %v464 = vpack.c.b16 %v436, %v435
  %v465 = vpack.c.b16 %v438, %v437
  %v466 = vpack.c.b16 %v440, %v439
  %v467 = vpack.c.b16 %v442, %v441
  %v468 = vpack.c.b16 %v444, %v443
  %v469 = vpack.c.b16 %v446, %v445
  %v470 = vpack.c.b16 %v448, %v447
  %v471 = vpack.c.b16 %v450, %v449
  %v472 = vpack.c.b16 %v452, %v451
  %v473 = vpack.c.b16 %v454, %v453
  %v474 = vpack.c.b16 %v456, %v455
  %v475 = vpack.c.b16 %v458, %v457
  %v476 = vpack.c.b16 %v460, %v459
  %vm477 = vcmask 130048
  %v479 = vsel %vm477, %v461, 0
  %v482 = vsel %vm477, %v462, 0
  %v485 = vsel %vm477, %v463, 0
  %v488 = vsel %vm477, %v464, 0
  %v491 = vsel %vm477, %v465, 0
  %v494 = vsel %vm477, %v466, 0
  %v497 = vsel %vm477, %v467, 0
  %v500 = vsel %vm477, %v468, 0
  %v503 = vsel %vm477, %v469, 0
  %v506 = vsel %vm477, %v470, 0
  %v509 = vsel %vm477, %v471, 0
  %v512 = vsel %vm477, %v472, 0
  %v515 = vsel %vm477, %v473, 0
  %v518 = vsel %vm477, %v474, 0
  %v521 = vsel %vm477, %v475, 0
  %v524 = vsel %vm477, %v476, 0
  %526 = vmatprep.subr.bf16.mxu0 0
  %527 = vmatpush1.bf16.msra.mxu0 %v36
  %528 = vmatprep.subr.bf16.mxu0 0
  %529 = vmatpush1.bf16.msra.mxu0 0
  %530 = vmatprep.subr.bf16.mxu0 0
  %531 = vmatpush1.bf16.msra.mxu0 0
  %532 = vmatprep.subr.bf16.mxu0 0
  %533 = vmatpush1.bf16.msra.mxu0 0
  %534 = vmatprep.subr.bf16.mxu0 0
  %535 = vmatpush1.bf16.msra.mxu0 0
  %536 = vmatprep.subr.bf16.mxu0 0
  %537 = vmatpush1.bf16.msra.mxu0 0
  %538 = vmatprep.subr.bf16.mxu0 0
  %539 = vmatpush1.bf16.msra.mxu0 0
  %540 = vmatprep.subr.bf16.mxu0 0
  %541 = vmatpush1.bf16.msra.mxu0 0
  %542 = vmatprep.subr.bf16.mxu0 0
  %543 = vmatpush1.bf16.msra.mxu0 0
  %544 = vmatprep.subr.bf16.mxu0 0
  %545 = vmatpush1.bf16.msra.mxu0 0
  %546 = vmatprep.subr.bf16.mxu0 0
  %547 = vmatpush1.bf16.msra.mxu0 0
  %548 = vmatprep.subr.bf16.mxu0 0
  %549 = vmatpush1.bf16.msra.mxu0 0
  %550 = vmatprep.subr.bf16.mxu0 0
  %551 = vmatpush1.bf16.msra.mxu0 0
  %552 = vmatprep.subr.bf16.mxu0 0
  %553 = vmatpush1.bf16.msra.mxu0 0
  %554 = vmatprep.subr.bf16.mxu0 0
  %555 = vmatpush1.bf16.msra.mxu0 0
  %556 = vmatprep.subr.bf16.mxu0 0
  %557 = vmatpush1.bf16.msra.mxu0 0
  %558 = vmatprep.mubr.bf16.mxu0 0
  %559 = vmatmul.mubr.bf16.gmra.mrb[0].mxu0 %v479
  %v560 = vpop.f32.mrb[0].mxu0
  %v561 = vadd.f32 %v271, %v560
  %v562 = vpop.f32.mrb[0].mxu0
  %v563 = vpop.f32.mrb[0].mxu0
  %v564 = vadd.f32 %v274, %v563
  %v565 = vpop.f32.mrb[0].mxu0
  %566 = vmatprep.mubr.bf16.mxu0 0
  %567 = vmatmul.mubr.bf16.gmra.mrb[0].mxu0 %v482
  %v568 = vpop.f32.mrb[0].mxu0
  %v569 = vadd.f32 %v279, %v568
  %v570 = vpop.f32.mrb[0].mxu0
  %v571 = vpop.f32.mrb[0].mxu0
  %v572 = vadd.f32 %v282, %v571
  %v573 = vpop.f32.mrb[0].mxu0
  %574 = vmatprep.mubr.bf16.mxu0 0
  %575 = vmatmul.mubr.bf16.gmra.mrb[0].mxu0 %v485
  %v576 = vpop.f32.mrb[0].mxu0
  %v577 = vadd.f32 %v287, %v576
  %v578 = vpop.f32.mrb[0].mxu0
  %v579 = vpop.f32.mrb[0].mxu0
  %v580 = vadd.f32 %v290, %v579
  %v581 = vpop.f32.mrb[0].mxu0
  %582 = vmatprep.mubr.bf16.mxu0 0
  %583 = vmatmul.mubr.bf16.gmra.mrb[0].mxu0 %v488
  %v584 = vpop.f32.mrb[0].mxu0
  %v585 = vadd.f32 %v295, %v584
  %v586 = vpop.f32.mrb[0].mxu0
  %v587 = vpop.f32.mrb[0].mxu0
  %v588 = vadd.f32 %v298, %v587
  %v589 = vpop.f32.mrb[0].mxu0
  %590 = vmatprep.mubr.bf16.mxu0 0
  %591 = vmatmul.mubr.bf16.gmra.mrb[0].mxu0 %v491
  %v592 = vpop.f32.mrb[0].mxu0
  %v593 = vadd.f32 %v303, %v592
  %v594 = vpop.f32.mrb[0].mxu0
  %v595 = vpop.f32.mrb[0].mxu0
  %v596 = vadd.f32 %v306, %v595
  %v597 = vpop.f32.mrb[0].mxu0
  %598 = vmatprep.mubr.bf16.mxu0 0
  %599 = vmatmul.mubr.bf16.gmra.mrb[0].mxu0 %v494
  %v600 = vpop.f32.mrb[0].mxu0
  %v601 = vadd.f32 %v311, %v600
  %v602 = vpop.f32.mrb[0].mxu0
  %v603 = vpop.f32.mrb[0].mxu0
  %v604 = vadd.f32 %v314, %v603
  %v605 = vpop.f32.mrb[0].mxu0
  %606 = vmatprep.mubr.bf16.mxu0 0
  %607 = vmatmul.mubr.bf16.gmra.mrb[0].mxu0 %v497
  %v608 = vpop.f32.mrb[0].mxu0
  %v609 = vadd.f32 %v319, %v608
  %v610 = vpop.f32.mrb[0].mxu0
  %v611 = vpop.f32.mrb[0].mxu0
  %v612 = vadd.f32 %v322, %v611
  %v613 = vpop.f32.mrb[0].mxu0
  %614 = vmatprep.mubr.bf16.mxu0 0
  %615 = vmatmul.mubr.bf16.gmra.mrb[0].mxu0 %v500
  %v616 = vpop.f32.mrb[0].mxu0
  %v617 = vadd.f32 %v327, %v616
  %v618 = vpop.f32.mrb[0].mxu0
  %v619 = vpop.f32.mrb[0].mxu0
  %v620 = vadd.f32 %v330, %v619
  %v621 = vpop.f32.mrb[0].mxu0
  %622 = vmatprep.mubr.bf16.mxu0 0
  %623 = vmatmul.mubr.bf16.gmra.mrb[0].mxu0 %v503
  %v624 = vpop.f32.mrb[0].mxu0
  %v625 = vadd.f32 %v335, %v624
  %v626 = vpop.f32.mrb[0].mxu0
  %v627 = vpop.f32.mrb[0].mxu0
  %v628 = vadd.f32 %v338, %v627
  %v629 = vpop.f32.mrb[0].mxu0
  %630 = vmatprep.mubr.bf16.mxu0 0
  %631 = vmatmul.mubr.bf16.gmra.mrb[0].mxu0 %v506
  %v632 = vpop.f32.mrb[0].mxu0
  %v633 = vadd.f32 %v343, %v632
  %v634 = vpop.f32.mrb[0].mxu0
  %v635 = vpop.f32.mrb[0].mxu0
  %v636 = vadd.f32 %v346, %v635
  %v637 = vpop.f32.mrb[0].mxu0
  %638 = vmatprep.mubr.bf16.mxu0 0
  %639 = vmatmul.mubr.bf16.gmra.mrb[0].mxu0 %v509
  %v640 = vpop.f32.mrb[0].mxu0
  %v641 = vadd.f32 %v351, %v640
  %v642 = vpop.f32.mrb[0].mxu0
  %v643 = vpop.f32.mrb[0].mxu0
  %v644 = vadd.f32 %v354, %v643
  %v645 = vpop.f32.mrb[0].mxu0
  %646 = vmatprep.mubr.bf16.mxu0 0
  %647 = vmatmul.mubr.bf16.gmra.mrb[0].mxu0 %v512
  %v648 = vpop.f32.mrb[0].mxu0
  %v649 = vadd.f32 %v359, %v648
  %v650 = vpop.f32.mrb[0].mxu0
  %v651 = vpop.f32.mrb[0].mxu0
  %v652 = vadd.f32 %v362, %v651
  %v653 = vpop.f32.mrb[0].mxu0
  %654 = vmatprep.mubr.bf16.mxu0 0
  %655 = vmatmul.mubr.bf16.gmra.mrb[0].mxu0 %v515
  %v656 = vpop.f32.mrb[0].mxu0
  %v657 = vadd.f32 %v367, %v656
  %v658 = vpop.f32.mrb[0].mxu0
  %v659 = vpop.f32.mrb[0].mxu0
  %v660 = vadd.f32 %v370, %v659
  %v661 = vpop.f32.mrb[0].mxu0
  %662 = vmatprep.mubr.bf16.mxu0 0
  %663 = vmatmul.mubr.bf16.gmra.mrb[0].mxu0 %v518
  %v664 = vpop.f32.mrb[0].mxu0
  %v665 = vadd.f32 %v375, %v664
  %v666 = vpop.f32.mrb[0].mxu0
  %v667 = vpop.f32.mrb[0].mxu0
  %v668 = vadd.f32 %v378, %v667
  %v669 = vpop.f32.mrb[0].mxu0
  %670 = vmatprep.mubr.bf16.mxu0 0
  %671 = vmatmul.mubr.bf16.gmra.mrb[0].mxu0 %v521
  %v672 = vpop.f32.mrb[0].mxu0
  %v673 = vadd.f32 %v383, %v672
  %v674 = vpop.f32.mrb[0].mxu0
  %v675 = vpop.f32.mrb[0].mxu0
  %v676 = vadd.f32 %v386, %v675
  %v677 = vpop.f32.mrb[0].mxu0
  %678 = vmatprep.mubr.bf16.mxu0 0
  %679 = vmatmul.mubr.bf16.gmra.mrb[0].mxu0 %v524
  %v680 = vpop.f32.mrb[0].mxu0
  %v681 = vadd.f32 %v391, %v680
  %v682 = vpop.f32.mrb[0].mxu0
  %v683 = vpop.f32.mrb[0].mxu0
  %v684 = vadd.f32 %v394, %v683
  %v685 = vpop.f32.mrb[0].mxu0
  %686 = vdwg.mxu0
  %v687 = vld [vmem:[%s4] sm:$0xff]
  %v688 = vld [vmem:[%s4 + $0x8] sm:$0xff]
  %v689 = vld [vmem:[%s4 + $0x10] sm:$0xff]
  %v690 = vld [vmem:[%s4 + $0x18] sm:$0xff]
  %v691 = vld [vmem:[%s4 + $0x20] sm:$0xff]
  %v692 = vld [vmem:[%s4 + $0x28] sm:$0xff]
  %v693 = vld [vmem:[%s4 + $0x30] sm:$0xff]
  %v694 = vld [vmem:[%s4 + $0x38] sm:$0xff]
  %v695 = vld [vmem:[%s4 + $0x40] sm:$0xff]
  %v696 = vld [vmem:[%s4 + $0x48] sm:$0xff]
  %v697 = vld [vmem:[%s4 + $0x50] sm:$0xff]
  %v698 = vld [vmem:[%s4 + $0x58] sm:$0xff]
  %v699 = vld [vmem:[%s4 + $0x60] sm:$0xff]
  %v700 = vld [vmem:[%s4 + $0x68] sm:$0xff]
  %v701 = vld [vmem:[%s4 + $0x70] sm:$0xff]
  %v702 = vld [vmem:[%s4 + $0x78] sm:$0xff]
  %v703 = vld [vmem:[%s4 + $0x80] sm:$0xff]
  %v704 = vld [vmem:[%s4 + $0x88] sm:$0xff]
  %v705 = vld [vmem:[%s4 + $0x90] sm:$0xff]
  %v706 = vld [vmem:[%s4 + $0x98] sm:$0xff]
  %v707 = vld [vmem:[%s4 + $0xa0] sm:$0xff]
  %v708 = vld [vmem:[%s4 + $0xa8] sm:$0xff]
  %v709 = vld [vmem:[%s4 + $0xb0] sm:$0xff]
  %v710 = vld [vmem:[%s4 + $0xb8] sm:$0xff]
  %v711 = vld [vmem:[%s4 + $0xc0] sm:$0xff]
  %v712 = vld [vmem:[%s4 + $0xc8] sm:$0xff]
  %v713 = vld [vmem:[%s4 + $0xd0] sm:$0xff]
  %v714 = vld [vmem:[%s4 + $0xd8] sm:$0xff]
  %v715 = vld [vmem:[%s4 + $0xe0] sm:$0xff]
  %v716 = vld [vmem:[%s4 + $0xe8] sm:$0xff]
  %v717 = vld [vmem:[%s4 + $0xf0] sm:$0xff]
  %v718 = vld [vmem:[%s4 + $0xf8] sm:$0xff]
  %720 = vset.pattern.permute.xlu0 0
  %721 = vperm.xlu0 %720, %v687
  %v722 = vpop.permute.xlu0 %721
  %725 = vset.pattern.permute.xlu0 0
  %726 = vperm.xlu0 %725, %v688
  %v727 = vpop.permute.xlu0 %726
  %730 = vset.pattern.permute.xlu0 0
  %731 = vperm.xlu0 %730, %v689
  %v732 = vpop.permute.xlu0 %731
  %735 = vset.pattern.permute.xlu0 0
  %736 = vperm.xlu0 %735, %v690
  %v737 = vpop.permute.xlu0 %736
  %740 = vset.pattern.permute.xlu0 0
  %741 = vperm.xlu0 %740, %v691
  %v742 = vpop.permute.xlu0 %741
  %745 = vset.pattern.permute.xlu0 0
  %746 = vperm.xlu0 %745, %v692
  %v747 = vpop.permute.xlu0 %746
  %750 = vset.pattern.permute.xlu0 0
  %751 = vperm.xlu0 %750, %v693
  %v752 = vpop.permute.xlu0 %751
  %755 = vset.pattern.permute.xlu0 0
  %756 = vperm.xlu0 %755, %v694
  %v757 = vpop.permute.xlu0 %756
  %760 = vset.pattern.permute.xlu0 0
  %761 = vperm.xlu0 %760, %v695
  %v762 = vpop.permute.xlu0 %761
  %765 = vset.pattern.permute.xlu0 0
  %766 = vperm.xlu0 %765, %v696
  %v767 = vpop.permute.xlu0 %766
  %770 = vset.pattern.permute.xlu0 0
  %771 = vperm.xlu0 %770, %v697
  %v772 = vpop.permute.xlu0 %771
  %775 = vset.pattern.permute.xlu0 0
  %776 = vperm.xlu0 %775, %v698
  %v777 = vpop.permute.xlu0 %776
  %780 = vset.pattern.permute.xlu0 0
  %781 = vperm.xlu0 %780, %v699
  %v782 = vpop.permute.xlu0 %781
  %785 = vset.pattern.permute.xlu0 0
  %786 = vperm.xlu0 %785, %v700
  %v787 = vpop.permute.xlu0 %786
  %790 = vset.pattern.permute.xlu0 0
  %791 = vperm.xlu0 %790, %v701
  %v792 = vpop.permute.xlu0 %791
  %795 = vset.pattern.permute.xlu0 0
  %796 = vperm.xlu0 %795, %v702
  %v797 = vpop.permute.xlu0 %796
  %800 = vset.pattern.permute.xlu0 0
  %801 = vperm.xlu0 %800, %v703
  %v802 = vpop.permute.xlu0 %801
  %805 = vset.pattern.permute.xlu0 0
  %806 = vperm.xlu0 %805, %v704
  %v807 = vpop.permute.xlu0 %806
  %810 = vset.pattern.permute.xlu0 0
  %811 = vperm.xlu0 %810, %v705
  %v812 = vpop.permute.xlu0 %811
  %815 = vset.pattern.permute.xlu0 0
  %816 = vperm.xlu0 %815, %v706
  %v817 = vpop.permute.xlu0 %816
  %820 = vset.pattern.permute.xlu0 0
  %821 = vperm.xlu0 %820, %v707
  %v822 = vpop.permute.xlu0 %821
  %825 = vset.pattern.permute.xlu0 0
  %826 = vperm.xlu0 %825, %v708
  %v827 = vpop.permute.xlu0 %826
  %830 = vset.pattern.permute.xlu0 0
  %831 = vperm.xlu0 %830, %v709
  %v832 = vpop.permute.xlu0 %831
  %835 = vset.pattern.permute.xlu0 0
  %836 = vperm.xlu0 %835, %v710
  %v837 = vpop.permute.xlu0 %836
  %840 = vset.pattern.permute.xlu0 0
  %841 = vperm.xlu0 %840, %v711
  %v842 = vpop.permute.xlu0 %841
  %845 = vset.pattern.permute.xlu0 0
  %846 = vperm.xlu0 %845, %v712
  %v847 = vpop.permute.xlu0 %846
  %850 = vset.pattern.permute.xlu0 0
  %851 = vperm.xlu0 %850, %v713
  %v852 = vpop.permute.xlu0 %851
  %855 = vset.pattern.permute.xlu0 0
  %856 = vperm.xlu0 %855, %v714
  %v857 = vpop.permute.xlu0 %856
  %860 = vset.pattern.permute.xlu0 0
  %861 = vperm.xlu0 %860, %v715
  %v862 = vpop.permute.xlu0 %861
  %865 = vset.pattern.permute.xlu0 0
  %866 = vperm.xlu0 %865, %v716
  %v867 = vpop.permute.xlu0 %866
  %870 = vset.pattern.permute.xlu0 0
  %871 = vperm.xlu0 %870, %v717
  %v872 = vpop.permute.xlu0 %871
  %875 = vset.pattern.permute.xlu0 0
  %876 = vperm.xlu0 %875, %v718
  %v877 = vpop.permute.xlu0 %876
  %v879 = vadd.f32 %v561, %v722
  %v880 = vadd.f32 %v564, %v727
  %v881 = vadd.f32 %v569, %v732
  %v882 = vadd.f32 %v572, %v737
  %v883 = vadd.f32 %v577, %v742
  %v884 = vadd.f32 %v580, %v747
  %v885 = vadd.f32 %v585, %v752
  %v886 = vadd.f32 %v588, %v757
  %v887 = vadd.f32 %v593, %v762
  %v888 = vadd.f32 %v596, %v767
  %v889 = vadd.f32 %v601, %v772
  %v890 = vadd.f32 %v604, %v777
  %v891 = vadd.f32 %v609, %v782
  %v892 = vadd.f32 %v612, %v787
  %v893 = vadd.f32 %v617, %v792
  %v894 = vadd.f32 %v620, %v797
  %v895 = vadd.f32 %v625, %v802
  %v896 = vadd.f32 %v628, %v807
  %v897 = vadd.f32 %v633, %v812
  %v898 = vadd.f32 %v636, %v817
  %v899 = vadd.f32 %v641, %v822
  %v900 = vadd.f32 %v644, %v827
  %v901 = vadd.f32 %v649, %v832
  %v902 = vadd.f32 %v652, %v837
  %v903 = vadd.f32 %v657, %v842
  %v904 = vadd.f32 %v660, %v847
  %v905 = vadd.f32 %v665, %v852
  %v906 = vadd.f32 %v668, %v857
  %v907 = vadd.f32 %v673, %v862
  %v908 = vadd.f32 %v676, %v867
  %v909 = vadd.f32 %v681, %v872
  %v910 = vadd.f32 %v684, %v877
  %v911 = vmax.f32 %v879, 0.0
  %v912 = vmax.f32 %v880, 0.0
  %v913 = vmax.f32 %v881, 0.0
  %v914 = vmax.f32 %v882, 0.0
  %v915 = vmax.f32 %v883, 0.0
  %v916 = vmax.f32 %v884, 0.0
  %v917 = vmax.f32 %v885, 0.0
  %v918 = vmax.f32 %v886, 0.0
  %v919 = vmax.f32 %v887, 0.0
  %v920 = vmax.f32 %v888, 0.0
  %v921 = vmax.f32 %v889, 0.0
  %v922 = vmax.f32 %v890, 0.0
  %v923 = vmax.f32 %v891, 0.0
  %v924 = vmax.f32 %v892, 0.0
  %v925 = vmax.f32 %v893, 0.0
  %v926 = vmax.f32 %v894, 0.0
  %v927 = vmax.f32 %v895, 0.0
  %v928 = vmax.f32 %v896, 0.0
  %v929 = vmax.f32 %v897, 0.0
  %v930 = vmax.f32 %v898, 0.0
  %v931 = vmax.f32 %v899, 0.0
  %v932 = vmax.f32 %v900, 0.0
  %v933 = vmax.f32 %v901, 0.0
  %v934 = vmax.f32 %v902, 0.0
  %v935 = vmax.f32 %v903, 0.0
  %v936 = vmax.f32 %v904, 0.0
  %v937 = vmax.f32 %v905, 0.0
  %v938 = vmax.f32 %v906, 0.0
  %v939 = vmax.f32 %v907, 0.0
  %v940 = vmax.f32 %v908, 0.0
  %v941 = vmax.f32 %v909, 0.0
  %v942 = vmax.f32 %v910, 0.0
  %v943 = vld [vmem:[%s5] sm:$0xff]
  %v944 = vld [vmem:[%s5 + $0x8] sm:$0xff]
  %v945 = vld [vmem:[%s5 + $0x10] sm:$0xff]
  %v946 = vld [vmem:[%s5 + $0x18] sm:$0xff]
  %v947 = vld [vmem:[%s5 + $0x20] sm:$0xff]
  %v948 = vld [vmem:[%s5 + $0x28] sm:$0xff]
  %v949 = vld [vmem:[%s5 + $0x30] sm:$0xff]
  %v950 = vld [vmem:[%s5 + $0x38] sm:$0xff]
  %v951 = vld [vmem:[%s5 + $0x40] sm:$0xff]
  %v952 = vld [vmem:[%s5 + $0x48] sm:$0xff]
  %v953 = vld [vmem:[%s5 + $0x50] sm:$0xff]
  %v954 = vld [vmem:[%s5 + $0x58] sm:$0xff]
  %v955 = vld [vmem:[%s5 + $0x60] sm:$0xff]
  %v956 = vld [vmem:[%s5 + $0x68] sm:$0xff]
  %v957 = vld [vmem:[%s5 + $0x70] sm:$0xff]
  %v958 = vld [vmem:[%s5 + $0x78] sm:$0xff]
  %v959 = vld [vmem:[%s5 + $0x80] sm:$0xff]
  %v960 = vld [vmem:[%s5 + $0x88] sm:$0xff]
  %v961 = vld [vmem:[%s5 + $0x90] sm:$0xff]
  %v962 = vld [vmem:[%s5 + $0x98] sm:$0xff]
  %v963 = vld [vmem:[%s5 + $0xa0] sm:$0xff]
  %v964 = vld [vmem:[%s5 + $0xa8] sm:$0xff]
  %v965 = vld [vmem:[%s5 + $0xb0] sm:$0xff]
  %v966 = vld [vmem:[%s5 + $0xb8] sm:$0xff]
  %v967 = vld [vmem:[%s5 + $0xc0] sm:$0xff]
  %v968 = vld [vmem:[%s5 + $0xc8] sm:$0xff]
  %v969 = vld [vmem:[%s5 + $0xd0] sm:$0xff]
  %v970 = vld [vmem:[%s5 + $0xd8] sm:$0xff]
  %v971 = vld [vmem:[%s5 + $0xe0] sm:$0xff]
  %v972 = vld [vmem:[%s5 + $0xe8] sm:$0xff]
  %v973 = vld [vmem:[%s5 + $0xf0] sm:$0xff]
  %v974 = vld [vmem:[%s5 + $0xf8] sm:$0xff]
  %v975 = vpack.c.bf16 %v912, %v911
  %v976 = vpack.c.bf16 %v914, %v913
  %v977 = vpack.c.bf16 %v916, %v915
  %v978 = vpack.c.bf16 %v918, %v917
  %v979 = vpack.c.bf16 %v920, %v919
  %v980 = vpack.c.bf16 %v922, %v921
  %v981 = vpack.c.bf16 %v924, %v923
  %v982 = vpack.c.bf16 %v926, %v925
  %v983 = vpack.c.bf16 %v928, %v927
  %v984 = vpack.c.bf16 %v930, %v929
  %v985 = vpack.c.bf16 %v932, %v931
  %v986 = vpack.c.bf16 %v934, %v933
  %v987 = vpack.c.bf16 %v936, %v935
  %v988 = vpack.c.bf16 %v938, %v937
  %v989 = vpack.c.bf16 %v940, %v939
  %v990 = vpack.c.bf16 %v942, %v941
  %v991 = vld [vmem:[%s6] sm:$0xff]
  %v992 = vld [vmem:[%s6 + $0x8] sm:$0xff]
  %v993 = vld [vmem:[%s6 + $0x10] sm:$0xff]
  %v994 = vld [vmem:[%s6 + $0x18] sm:$0xff]
  %v995 = vld [vmem:[%s6 + $0x20] sm:$0xff]
  %v996 = vld [vmem:[%s6 + $0x28] sm:$0xff]
  %v997 = vld [vmem:[%s6 + $0x30] sm:$0xff]
  %v998 = vld [vmem:[%s6 + $0x38] sm:$0xff]
  %v999 = vld [vmem:[%s6 + $0x40] sm:$0xff]
  %v1000 = vld [vmem:[%s6 + $0x48] sm:$0xff]
  %v1001 = vld [vmem:[%s6 + $0x50] sm:$0xff]
  %v1002 = vld [vmem:[%s6 + $0x58] sm:$0xff]
  %v1003 = vld [vmem:[%s6 + $0x60] sm:$0xff]
  %v1004 = vld [vmem:[%s6 + $0x68] sm:$0xff]
  %v1005 = vld [vmem:[%s6 + $0x70] sm:$0xff]
  %v1006 = vld [vmem:[%s6 + $0x78] sm:$0xff]
  %v1007 = vld [vmem:[%s6 + $0x80] sm:$0xff]
  %v1008 = vld [vmem:[%s6 + $0x88] sm:$0xff]
  %v1009 = vld [vmem:[%s6 + $0x90] sm:$0xff]
  %v1010 = vld [vmem:[%s6 + $0x98] sm:$0xff]
  %v1011 = vld [vmem:[%s6 + $0xa0] sm:$0xff]
  %v1012 = vld [vmem:[%s6 + $0xa8] sm:$0xff]
  %v1013 = vld [vmem:[%s6 + $0xb0] sm:$0xff]
  %v1014 = vld [vmem:[%s6 + $0xb8] sm:$0xff]
  %v1015 = vld [vmem:[%s6 + $0xc0] sm:$0xff]
  %v1016 = vld [vmem:[%s6 + $0xc8] sm:$0xff]
  %v1017 = vld [vmem:[%s6 + $0xd0] sm:$0xff]
  %v1018 = vld [vmem:[%s6 + $0xd8] sm:$0xff]
  %v1019 = vld [vmem:[%s6 + $0xe0] sm:$0xff]
  %v1020 = vld [vmem:[%s6 + $0xe8] sm:$0xff]
  %v1021 = vld [vmem:[%s6 + $0xf0] sm:$0xff]
  %v1022 = vld [vmem:[%s6 + $0xf8] sm:$0xff]
  %1024 = vset.pattern.permute.xlu0 0
  %1025 = vperm.xlu0 %1024, %v991
  %v1026 = vpop.permute.xlu0 %1025
  %1029 = vset.pattern.permute.xlu0 0
  %1030 = vperm.xlu0 %1029, %v992
  %v1031 = vpop.permute.xlu0 %1030
  %1034 = vset.pattern.permute.xlu0 0
  %1035 = vperm.xlu0 %1034, %v993
  %v1036 = vpop.permute.xlu0 %1035
  %1039 = vset.pattern.permute.xlu0 0
  %1040 = vperm.xlu0 %1039, %v994
  %v1041 = vpop.permute.xlu0 %1040
  %1044 = vset.pattern.permute.xlu0 0
  %1045 = vperm.xlu0 %1044, %v995
  %v1046 = vpop.permute.xlu0 %1045
  %1049 = vset.pattern.permute.xlu0 0
  %1050 = vperm.xlu0 %1049, %v996
  %v1051 = vpop.permute.xlu0 %1050
  %1054 = vset.pattern.permute.xlu0 0
  %1055 = vperm.xlu0 %1054, %v997
  %v1056 = vpop.permute.xlu0 %1055
  %1059 = vset.pattern.permute.xlu0 0
  %1060 = vperm.xlu0 %1059, %v998
  %v1061 = vpop.permute.xlu0 %1060
  %1064 = vset.pattern.permute.xlu0 0
  %1065 = vperm.xlu0 %1064, %v999
  %v1066 = vpop.permute.xlu0 %1065
  %1069 = vset.pattern.permute.xlu0 0
  %1070 = vperm.xlu0 %1069, %v1000
  %v1071 = vpop.permute.xlu0 %1070
  %1074 = vset.pattern.permute.xlu0 0
  %1075 = vperm.xlu0 %1074, %v1001
  %v1076 = vpop.permute.xlu0 %1075
  %1079 = vset.pattern.permute.xlu0 0
  %1080 = vperm.xlu0 %1079, %v1002
  %v1081 = vpop.permute.xlu0 %1080
  %1084 = vset.pattern.permute.xlu0 0
  %1085 = vperm.xlu0 %1084, %v1003
  %v1086 = vpop.permute.xlu0 %1085
  %1089 = vset.pattern.permute.xlu0 0
  %1090 = vperm.xlu0 %1089, %v1004
  %v1091 = vpop.permute.xlu0 %1090
  %1094 = vset.pattern.permute.xlu0 0
  %1095 = vperm.xlu0 %1094, %v1005
  %v1096 = vpop.permute.xlu0 %1095
  %1099 = vset.pattern.permute.xlu0 0
  %1100 = vperm.xlu0 %1099, %v1006
  %v1101 = vpop.permute.xlu0 %1100
  %1104 = vset.pattern.permute.xlu0 0
  %1105 = vperm.xlu0 %1104, %v1007
  %v1106 = vpop.permute.xlu0 %1105
  %1109 = vset.pattern.permute.xlu0 0
  %1110 = vperm.xlu0 %1109, %v1008
  %v1111 = vpop.permute.xlu0 %1110
  %1114 = vset.pattern.permute.xlu0 0
  %1115 = vperm.xlu0 %1114, %v1009
  %v1116 = vpop.permute.xlu0 %1115
  %1119 = vset.pattern.permute.xlu0 0
  %1120 = vperm.xlu0 %1119, %v1010
  %v1121 = vpop.permute.xlu0 %1120
  %1124 = vset.pattern.permute.xlu0 0
  %1125 = vperm.xlu0 %1124, %v1011
  %v1126 = vpop.permute.xlu0 %1125
  %1129 = vset.pattern.permute.xlu0 0
  %1130 = vperm.xlu0 %1129, %v1012
  %v1131 = vpop.permute.xlu0 %1130
  %1134 = vset.pattern.permute.xlu0 0
  %1135 = vperm.xlu0 %1134, %v1013
  %v1136 = vpop.permute.xlu0 %1135
  %1139 = vset.pattern.permute.xlu0 0
  %1140 = vperm.xlu0 %1139, %v1014
  %v1141 = vpop.permute.xlu0 %1140
  %1144 = vset.pattern.permute.xlu0 0
  %1145 = vperm.xlu0 %1144, %v1015
  %v1146 = vpop.permute.xlu0 %1145
  %1149 = vset.pattern.permute.xlu0 0
  %1150 = vperm.xlu0 %1149, %v1016
  %v1151 = vpop.permute.xlu0 %1150
  %1154 = vset.pattern.permute.xlu0 0
  %1155 = vperm.xlu0 %1154, %v1017
  %v1156 = vpop.permute.xlu0 %1155
  %1159 = vset.pattern.permute.xlu0 0
  %1160 = vperm.xlu0 %1159, %v1018
  %v1161 = vpop.permute.xlu0 %1160
  %1164 = vset.pattern.permute.xlu0 0
  %1165 = vperm.xlu0 %1164, %v1019
  %v1166 = vpop.permute.xlu0 %1165
  %1169 = vset.pattern.permute.xlu0 0
  %1170 = vperm.xlu0 %1169, %v1020
  %v1171 = vpop.permute.xlu0 %1170
  %1174 = vset.pattern.permute.xlu0 0
  %1175 = vperm.xlu0 %1174, %v1021
  %v1176 = vpop.permute.xlu0 %1175
  %1179 = vset.pattern.permute.xlu0 0
  %1180 = vperm.xlu0 %1179, %v1022
  %v1181 = vpop.permute.xlu0 %1180
  %v1215 = vunpack.c.l.b16 %v943
  %v1216 = vunpack.c.h.b16 %v943
  %v1217 = vunpack.c.l.b16 %v944
  %v1218 = vunpack.c.h.b16 %v944
  %v1219 = vunpack.c.l.b16 %v945
  %v1220 = vunpack.c.h.b16 %v945
  %v1221 = vunpack.c.l.b16 %v946
  %v1222 = vunpack.c.h.b16 %v946
  %v1223 = vunpack.c.l.b16 %v947
  %v1224 = vunpack.c.h.b16 %v947
  %v1225 = vunpack.c.l.b16 %v948
  %v1226 = vunpack.c.h.b16 %v948
  %v1227 = vunpack.c.l.b16 %v949
  %v1228 = vunpack.c.h.b16 %v949
  %v1229 = vunpack.c.l.b16 %v950
  %v1230 = vunpack.c.h.b16 %v950
  %v1231 = vunpack.c.l.b16 %v951
  %v1232 = vunpack.c.h.b16 %v951
  %v1233 = vunpack.c.l.b16 %v952
  %v1234 = vunpack.c.h.b16 %v952
  %v1235 = vunpack.c.l.b16 %v953
  %v1236 = vunpack.c.h.b16 %v953
  %v1237 = vunpack.c.l.b16 %v954
  %v1238 = vunpack.c.h.b16 %v954
  %v1239 = vunpack.c.l.b16 %v955
  %v1240 = vunpack.c.h.b16 %v955
  %v1241 = vunpack.c.l.b16 %v956
  %v1242 = vunpack.c.h.b16 %v956
  %v1243 = vunpack.c.l.b16 %v957
  %v1244 = vunpack.c.h.b16 %v957
  %v1245 = vunpack.c.l.b16 %v958
  %v1246 = vunpack.c.h.b16 %v958
  %v1247 = vunpack.c.l.b16 %v959
  %v1248 = vunpack.c.h.b16 %v959
  %v1249 = vunpack.c.l.b16 %v960
  %v1250 = vunpack.c.h.b16 %v960
  %v1251 = vunpack.c.l.b16 %v961
  %v1252 = vunpack.c.h.b16 %v961
  %v1253 = vunpack.c.l.b16 %v962
  %v1254 = vunpack.c.h.b16 %v962
  %v1255 = vunpack.c.l.b16 %v963
  %v1256 = vunpack.c.h.b16 %v963
  %v1257 = vunpack.c.l.b16 %v964
  %v1258 = vunpack.c.h.b16 %v964
  %v1259 = vunpack.c.l.b16 %v965
  %v1260 = vunpack.c.h.b16 %v965
  %v1261 = vunpack.c.l.b16 %v966
  %v1262 = vunpack.c.h.b16 %v966
  %v1263 = vunpack.c.l.b16 %v967
  %v1264 = vunpack.c.h.b16 %v967
  %v1265 = vunpack.c.l.b16 %v968
  %v1266 = vunpack.c.h.b16 %v968
  %v1267 = vunpack.c.l.b16 %v969
  %v1268 = vunpack.c.h.b16 %v969
  %v1269 = vunpack.c.l.b16 %v970
  %v1270 = vunpack.c.h.b16 %v970
  %v1271 = vunpack.c.l.b16 %v971
  %v1272 = vunpack.c.h.b16 %v971
  %v1273 = vunpack.c.l.b16 %v972
  %v1274 = vunpack.c.h.b16 %v972
  %v1275 = vunpack.c.l.b16 %v973
  %v1276 = vunpack.c.h.b16 %v973
  %v1277 = vunpack.c.l.b16 %v974
  %v1278 = vunpack.c.h.b16 %v974
  %v1279 = vpack.c.b16 %v1217, %v1215
  %v1280 = vpack.c.b16 %v1218, %v1216
  %v1281 = vpack.c.b16 %v1221, %v1219
  %v1282 = vpack.c.b16 %v1222, %v1220
  %v1283 = vpack.c.b16 %v1225, %v1223
  %v1284 = vpack.c.b16 %v1226, %v1224
  %v1285 = vpack.c.b16 %v1229, %v1227
  %v1286 = vpack.c.b16 %v1230, %v1228
  %v1287 = vpack.c.b16 %v1233, %v1231
  %v1288 = vpack.c.b16 %v1234, %v1232
  %v1289 = vpack.c.b16 %v1237, %v1235
  %v1290 = vpack.c.b16 %v1238, %v1236
  %v1291 = vpack.c.b16 %v1241, %v1239
  %v1292 = vpack.c.b16 %v1242, %v1240
  %v1293 = vpack.c.b16 %v1245, %v1243
  %v1294 = vpack.c.b16 %v1246, %v1244
  %v1295 = vpack.c.b16 %v1249, %v1247
  %v1296 = vpack.c.b16 %v1250, %v1248
  %v1297 = vpack.c.b16 %v1253, %v1251
  %v1298 = vpack.c.b16 %v1254, %v1252
  %v1299 = vpack.c.b16 %v1257, %v1255
  %v1300 = vpack.c.b16 %v1258, %v1256
  %v1301 = vpack.c.b16 %v1261, %v1259
  %v1302 = vpack.c.b16 %v1262, %v1260
  %v1303 = vpack.c.b16 %v1265, %v1263
  %v1304 = vpack.c.b16 %v1266, %v1264
  %v1305 = vpack.c.b16 %v1269, %v1267
  %v1306 = vpack.c.b16 %v1270, %v1268
  %v1307 = vpack.c.b16 %v1273, %v1271
  %v1308 = vpack.c.b16 %v1274, %v1272
  %v1309 = vpack.c.b16 %v1277, %v1275
  %v1310 = vpack.c.b16 %v1278, %v1276
  %1343 = vmatprep.subr.bf16.mxu0 0
  %1344 = vmatpush1.bf16.msra.mxu0 %v975
  %1345 = vmatprep.subr.bf16.mxu0 0
  %1346 = vmatpush1.bf16.msra.mxu0 %v976
  %1347 = vmatprep.subr.bf16.mxu0 0
  %1348 = vmatpush1.bf16.msra.mxu0 %v977
  %1349 = vmatprep.subr.bf16.mxu0 0
  %1350 = vmatpush1.bf16.msra.mxu0 %v978
  %1351 = vmatprep.subr.bf16.mxu0 0
  %1352 = vmatpush1.bf16.msra.mxu0 %v979
  %1353 = vmatprep.subr.bf16.mxu0 0
  %1354 = vmatpush1.bf16.msra.mxu0 %v980
  %1355 = vmatprep.subr.bf16.mxu0 0
  %1356 = vmatpush1.bf16.msra.mxu0 %v981
  %1357 = vmatprep.subr.bf16.mxu0 0
  %1358 = vmatpush1.bf16.msra.mxu0 %v982
  %1359 = vmatprep.subr.bf16.mxu0 0
  %1360 = vmatpush1.bf16.msra.mxu0 %v983
  %1361 = vmatprep.subr.bf16.mxu0 0
  %1362 = vmatpush1.bf16.msra.mxu0 %v984
  %1363 = vmatprep.subr.bf16.mxu0 0
  %1364 = vmatpush1.bf16.msra.mxu0 %v985
  %1365 = vmatprep.subr.bf16.mxu0 0
  %1366 = vmatpush1.bf16.msra.mxu0 %v986
  %1367 = vmatprep.subr.bf16.mxu0 0
  %1368 = vmatpush1.bf16.msra.mxu0 %v987
  %1369 = vmatprep.subr.bf16.mxu0 0
  %1370 = vmatpush1.bf16.msra.mxu0 %v988
  %1371 = vmatprep.subr.bf16.mxu0 0
  %1372 = vmatpush1.bf16.msra.mxu0 %v989
  %1373 = vmatprep.subr.bf16.mxu0 0
  %1374 = vmatpush1.bf16.msra.mxu0 %v990
  %1375 = vmatprep.mubr.bf16.mxu0 %v1280
  %1376 = vmatmul.mubr.bf16.gmra.mrb[0].mxu0 %v1279
  %v1377 = vpop.f32.mrb[0].mxu0
  %v1378 = vadd.f32 %v1026, %v1377
  %v1379 = vpop.f32.mrb[0].mxu0
  %v1380 = vpop.f32.mrb[0].mxu0
  %v1381 = vadd.f32 %v1031, %v1380
  %v1382 = vpop.f32.mrb[0].mxu0
  %1383 = vmatprep.mubr.bf16.mxu0 %v1282
  %1384 = vmatmul.mubr.bf16.gmra.mrb[0].mxu0 %v1281
  %v1385 = vpop.f32.mrb[0].mxu0
  %v1386 = vadd.f32 %v1036, %v1385
  %v1387 = vpop.f32.mrb[0].mxu0
  %v1388 = vpop.f32.mrb[0].mxu0
  %v1389 = vadd.f32 %v1041, %v1388
  %v1390 = vpop.f32.mrb[0].mxu0
  %1391 = vmatprep.mubr.bf16.mxu0 %v1284
  %1392 = vmatmul.mubr.bf16.gmra.mrb[0].mxu0 %v1283
  %v1393 = vpop.f32.mrb[0].mxu0
  %v1394 = vadd.f32 %v1046, %v1393
  %v1395 = vpop.f32.mrb[0].mxu0
  %v1396 = vpop.f32.mrb[0].mxu0
  %v1397 = vadd.f32 %v1051, %v1396
  %v1398 = vpop.f32.mrb[0].mxu0
  %1399 = vmatprep.mubr.bf16.mxu0 %v1286
  %1400 = vmatmul.mubr.bf16.gmra.mrb[0].mxu0 %v1285
  %v1401 = vpop.f32.mrb[0].mxu0
  %v1402 = vadd.f32 %v1056, %v1401
  %v1403 = vpop.f32.mrb[0].mxu0
  %v1404 = vpop.f32.mrb[0].mxu0
  %v1405 = vadd.f32 %v1061, %v1404
  %v1406 = vpop.f32.mrb[0].mxu0
  %1407 = vmatprep.mubr.bf16.mxu0 %v1288
  %1408 = vmatmul.mubr.bf16.gmra.mrb[0].mxu0 %v1287
  %v1409 = vpop.f32.mrb[0].mxu0
  %v1410 = vadd.f32 %v1066, %v1409
  %v1411 = vpop.f32.mrb[0].mxu0
  %v1412 = vpop.f32.mrb[0].mxu0
  %v1413 = vadd.f32 %v1071, %v1412
  %v1414 = vpop.f32.mrb[0].mxu0
  %1415 = vmatprep.mubr.bf16.mxu0 %v1290
  %1416 = vmatmul.mubr.bf16.gmra.mrb[0].mxu0 %v1289
  %v1417 = vpop.f32.mrb[0].mxu0
  %v1418 = vadd.f32 %v1076, %v1417
  %v1419 = vpop.f32.mrb[0].mxu0
  %v1420 = vpop.f32.mrb[0].mxu0
  %v1421 = vadd.f32 %v1081, %v1420
  %v1422 = vpop.f32.mrb[0].mxu0
  %1423 = vmatprep.mubr.bf16.mxu0 %v1292
  %1424 = vmatmul.mubr.bf16.gmra.mrb[0].mxu0 %v1291
  %v1425 = vpop.f32.mrb[0].mxu0
  %v1426 = vadd.f32 %v1086, %v1425
  %v1427 = vpop.f32.mrb[0].mxu0
  %v1428 = vpop.f32.mrb[0].mxu0
  %v1429 = vadd.f32 %v1091, %v1428
  %v1430 = vpop.f32.mrb[0].mxu0
  %1431 = vmatprep.mubr.bf16.mxu0 %v1294
  %1432 = vmatmul.mubr.bf16.gmra.mrb[0].mxu0 %v1293
  %v1433 = vpop.f32.mrb[0].mxu0
  %v1434 = vadd.f32 %v1096, %v1433
  %v1435 = vpop.f32.mrb[0].mxu0
  %v1436 = vpop.f32.mrb[0].mxu0
  %v1437 = vadd.f32 %v1101, %v1436
  %v1438 = vpop.f32.mrb[0].mxu0
  %1439 = vmatprep.mubr.bf16.mxu0 %v1296
  %1440 = vmatmul.mubr.bf16.gmra.mrb[0].mxu0 %v1295
  %v1441 = vpop.f32.mrb[0].mxu0
  %v1442 = vadd.f32 %v1106, %v1441
  %v1443 = vpop.f32.mrb[0].mxu0
  %v1444 = vpop.f32.mrb[0].mxu0
  %v1445 = vadd.f32 %v1111, %v1444
  %v1446 = vpop.f32.mrb[0].mxu0
  %1447 = vmatprep.mubr.bf16.mxu0 %v1298
  %1448 = vmatmul.mubr.bf16.gmra.mrb[0].mxu0 %v1297
  %v1449 = vpop.f32.mrb[0].mxu0
  %v1450 = vadd.f32 %v1116, %v1449
  %v1451 = vpop.f32.mrb[0].mxu0
  %v1452 = vpop.f32.mrb[0].mxu0
  %v1453 = vadd.f32 %v1121, %v1452
  %v1454 = vpop.f32.mrb[0].mxu0
  %1455 = vmatprep.mubr.bf16.mxu0 %v1300
  %1456 = vmatmul.mubr.bf16.gmra.mrb[0].mxu0 %v1299
  %v1457 = vpop.f32.mrb[0].mxu0
  %v1458 = vadd.f32 %v1126, %v1457
  %v1459 = vpop.f32.mrb[0].mxu0
  %v1460 = vpop.f32.mrb[0].mxu0
  %v1461 = vadd.f32 %v1131, %v1460
  %v1462 = vpop.f32.mrb[0].mxu0
  %1463 = vmatprep.mubr.bf16.mxu0 %v1302
  %1464 = vmatmul.mubr.bf16.gmra.mrb[0].mxu0 %v1301
  %v1465 = vpop.f32.mrb[0].mxu0
  %v1466 = vadd.f32 %v1136, %v1465
  %v1467 = vpop.f32.mrb[0].mxu0
  %v1468 = vpop.f32.mrb[0].mxu0
  %v1469 = vadd.f32 %v1141, %v1468
  %v1470 = vpop.f32.mrb[0].mxu0
  %1471 = vmatprep.mubr.bf16.mxu0 %v1304
  %1472 = vmatmul.mubr.bf16.gmra.mrb[0].mxu0 %v1303
  %v1473 = vpop.f32.mrb[0].mxu0
  %v1474 = vadd.f32 %v1146, %v1473
  %v1475 = vpop.f32.mrb[0].mxu0
  %v1476 = vpop.f32.mrb[0].mxu0
  %v1477 = vadd.f32 %v1151, %v1476
  %v1478 = vpop.f32.mrb[0].mxu0
  %1479 = vmatprep.mubr.bf16.mxu0 %v1306
  %1480 = vmatmul.mubr.bf16.gmra.mrb[0].mxu0 %v1305
  %v1481 = vpop.f32.mrb[0].mxu0
  %v1482 = vadd.f32 %v1156, %v1481
  %v1483 = vpop.f32.mrb[0].mxu0
  %v1484 = vpop.f32.mrb[0].mxu0
  %v1485 = vadd.f32 %v1161, %v1484
  %v1486 = vpop.f32.mrb[0].mxu0
  %1487 = vmatprep.mubr.bf16.mxu0 %v1308
  %1488 = vmatmul.mubr.bf16.gmra.mrb[0].mxu0 %v1307
  %v1489 = vpop.f32.mrb[0].mxu0
  %v1490 = vadd.f32 %v1166, %v1489
  %v1491 = vpop.f32.mrb[0].mxu0
  %v1492 = vpop.f32.mrb[0].mxu0
  %v1493 = vadd.f32 %v1171, %v1492
  %v1494 = vpop.f32.mrb[0].mxu0
  %1495 = vmatprep.mubr.bf16.mxu0 %v1310
  %1496 = vmatmul.mubr.bf16.gmra.mrb[0].mxu0 %v1309
  %v1497 = vpop.f32.mrb[0].mxu0
  %v1498 = vadd.f32 %v1176, %v1497
  %v1499 = vpop.f32.mrb[0].mxu0
  %v1500 = vpop.f32.mrb[0].mxu0
  %v1501 = vadd.f32 %v1181, %v1500
  %v1502 = vpop.f32.mrb[0].mxu0
  %1503 = vdwg.mxu0
  %v1504 = vmax.f32 %v1378, 0.0
  %v1505 = vmax.f32 %v1381, 0.0
  %v1506 = vmax.f32 %v1386, 0.0
  %v1507 = vmax.f32 %v1389, 0.0
  %v1508 = vmax.f32 %v1394, 0.0
  %v1509 = vmax.f32 %v1397, 0.0
  %v1510 = vmax.f32 %v1402, 0.0
  %v1511 = vmax.f32 %v1405, 0.0
  %v1512 = vmax.f32 %v1410, 0.0
  %v1513 = vmax.f32 %v1413, 0.0
  %v1514 = vmax.f32 %v1418, 0.0
  %v1515 = vmax.f32 %v1421, 0.0
  %v1516 = vmax.f32 %v1426, 0.0
  %v1517 = vmax.f32 %v1429, 0.0
  %v1518 = vmax.f32 %v1434, 0.0
  %v1519 = vmax.f32 %v1437, 0.0
  %v1520 = vmax.f32 %v1442, 0.0
  %v1521 = vmax.f32 %v1445, 0.0
  %v1522 = vmax.f32 %v1450, 0.0
  %v1523 = vmax.f32 %v1453, 0.0
  %v1524 = vmax.f32 %v1458, 0.0
  %v1525 = vmax.f32 %v1461, 0.0
  %v1526 = vmax.f32 %v1466, 0.0
  %v1527 = vmax.f32 %v1469, 0.0
  %v1528 = vmax.f32 %v1474, 0.0
  %v1529 = vmax.f32 %v1477, 0.0
  %v1530 = vmax.f32 %v1482, 0.0
  %v1531 = vmax.f32 %v1485, 0.0
  %v1532 = vmax.f32 %v1490, 0.0
  %v1533 = vmax.f32 %v1493, 0.0
  %v1534 = vmax.f32 %v1498, 0.0
  %v1535 = vmax.f32 %v1501, 0.0
  %v1536 = vld [vmem:[%s7] sm:$0xff]
  %v1537 = vld [vmem:[%s7 + $0x8] sm:$0xff]
  %v1538 = vld [vmem:[%s7 + $0x10] sm:$0xff]
  %v1539 = vld [vmem:[%s7 + $0x18] sm:$0xff]
  %v1540 = vld [vmem:[%s7 + $0x20] sm:$0xff]
  %v1541 = vld [vmem:[%s7 + $0x28] sm:$0xff]
  %v1542 = vld [vmem:[%s7 + $0x30] sm:$0xff]
  %v1543 = vld [vmem:[%s7 + $0x38] sm:$0xff]
  %v1544 = vld [vmem:[%s7 + $0x40] sm:$0xff]
  %v1545 = vld [vmem:[%s7 + $0x48] sm:$0xff]
  %v1546 = vld [vmem:[%s7 + $0x50] sm:$0xff]
  %v1547 = vld [vmem:[%s7 + $0x58] sm:$0xff]
  %v1548 = vld [vmem:[%s7 + $0x60] sm:$0xff]
  %v1549 = vld [vmem:[%s7 + $0x68] sm:$0xff]
  %v1550 = vld [vmem:[%s7 + $0x70] sm:$0xff]
  %v1551 = vld [vmem:[%s7 + $0x78] sm:$0xff]
  %v1552 = vld [vmem:[%s7 + $0x80] sm:$0xff]
  %v1553 = vld [vmem:[%s7 + $0x88] sm:$0xff]
  %v1554 = vld [vmem:[%s7 + $0x90] sm:$0xff]
  %v1555 = vld [vmem:[%s7 + $0x98] sm:$0xff]
  %v1556 = vld [vmem:[%s7 + $0xa0] sm:$0xff]
  %v1557 = vld [vmem:[%s7 + $0xa8] sm:$0xff]
  %v1558 = vld [vmem:[%s7 + $0xb0] sm:$0xff]
  %v1559 = vld [vmem:[%s7 + $0xb8] sm:$0xff]
  %v1560 = vld [vmem:[%s7 + $0xc0] sm:$0xff]
  %v1561 = vld [vmem:[%s7 + $0xc8] sm:$0xff]
  %v1562 = vld [vmem:[%s7 + $0xd0] sm:$0xff]
  %v1563 = vld [vmem:[%s7 + $0xd8] sm:$0xff]
  %v1564 = vld [vmem:[%s7 + $0xe0] sm:$0xff]
  %v1565 = vld [vmem:[%s7 + $0xe8] sm:$0xff]
  %v1566 = vld [vmem:[%s7 + $0xf0] sm:$0xff]
  %v1567 = vld [vmem:[%s7 + $0xf8] sm:$0xff]
  %1569 = vset.pattern.permute.xlu0 0
  %1570 = vperm.xlu0 %1569, %v1536
  %v1571 = vpop.permute.xlu0 %1570
  %1574 = vset.pattern.permute.xlu0 0
  %1575 = vperm.xlu0 %1574, %v1537
  %v1576 = vpop.permute.xlu0 %1575
  %1579 = vset.pattern.permute.xlu0 0
  %1580 = vperm.xlu0 %1579, %v1538
  %v1581 = vpop.permute.xlu0 %1580
  %1584 = vset.pattern.permute.xlu0 0
  %1585 = vperm.xlu0 %1584, %v1539
  %v1586 = vpop.permute.xlu0 %1585
  %1589 = vset.pattern.permute.xlu0 0
  %1590 = vperm.xlu0 %1589, %v1540
  %v1591 = vpop.permute.xlu0 %1590
  %1594 = vset.pattern.permute.xlu0 0
  %1595 = vperm.xlu0 %1594, %v1541
  %v1596 = vpop.permute.xlu0 %1595
  %1599 = vset.pattern.permute.xlu0 0
  %1600 = vperm.xlu0 %1599, %v1542
  %v1601 = vpop.permute.xlu0 %1600
  %1604 = vset.pattern.permute.xlu0 0
  %1605 = vperm.xlu0 %1604, %v1543
  %v1606 = vpop.permute.xlu0 %1605
  %1609 = vset.pattern.permute.xlu0 0
  %1610 = vperm.xlu0 %1609, %v1544
  %v1611 = vpop.permute.xlu0 %1610
  %1614 = vset.pattern.permute.xlu0 0
  %1615 = vperm.xlu0 %1614, %v1545
  %v1616 = vpop.permute.xlu0 %1615
  %1619 = vset.pattern.permute.xlu0 0
  %1620 = vperm.xlu0 %1619, %v1546
  %v1621 = vpop.permute.xlu0 %1620
  %1624 = vset.pattern.permute.xlu0 0
  %1625 = vperm.xlu0 %1624, %v1547
  %v1626 = vpop.permute.xlu0 %1625
  %1629 = vset.pattern.permute.xlu0 0
  %1630 = vperm.xlu0 %1629, %v1548
  %v1631 = vpop.permute.xlu0 %1630
  %1634 = vset.pattern.permute.xlu0 0
  %1635 = vperm.xlu0 %1634, %v1549
  %v1636 = vpop.permute.xlu0 %1635
  %1639 = vset.pattern.permute.xlu0 0
  %1640 = vperm.xlu0 %1639, %v1550
  %v1641 = vpop.permute.xlu0 %1640
  %1644 = vset.pattern.permute.xlu0 0
  %1645 = vperm.xlu0 %1644, %v1551
  %v1646 = vpop.permute.xlu0 %1645
  %1649 = vset.pattern.permute.xlu0 0
  %1650 = vperm.xlu0 %1649, %v1552
  %v1651 = vpop.permute.xlu0 %1650
  %1654 = vset.pattern.permute.xlu0 0
  %1655 = vperm.xlu0 %1654, %v1553
  %v1656 = vpop.permute.xlu0 %1655
  %1659 = vset.pattern.permute.xlu0 0
  %1660 = vperm.xlu0 %1659, %v1554
  %v1661 = vpop.permute.xlu0 %1660
  %1664 = vset.pattern.permute.xlu0 0
  %1665 = vperm.xlu0 %1664, %v1555
  %v1666 = vpop.permute.xlu0 %1665
  %1669 = vset.pattern.permute.xlu0 0
  %1670 = vperm.xlu0 %1669, %v1556
  %v1671 = vpop.permute.xlu0 %1670
  %1674 = vset.pattern.permute.xlu0 0
  %1675 = vperm.xlu0 %1674, %v1557
  %v1676 = vpop.permute.xlu0 %1675
  %1679 = vset.pattern.permute.xlu0 0
  %1680 = vperm.xlu0 %1679, %v1558
  %v1681 = vpop.permute.xlu0 %1680
  %1684 = vset.pattern.permute.xlu0 0
  %1685 = vperm.xlu0 %1684, %v1559
  %v1686 = vpop.permute.xlu0 %1685
  %1689 = vset.pattern.permute.xlu0 0
  %1690 = vperm.xlu0 %1689, %v1560
  %v1691 = vpop.permute.xlu0 %1690
  %1694 = vset.pattern.permute.xlu0 0
  %1695 = vperm.xlu0 %1694, %v1561
  %v1696 = vpop.permute.xlu0 %1695
  %1699 = vset.pattern.permute.xlu0 0
  %1700 = vperm.xlu0 %1699, %v1562
  %v1701 = vpop.permute.xlu0 %1700
  %1704 = vset.pattern.permute.xlu0 0
  %1705 = vperm.xlu0 %1704, %v1563
  %v1706 = vpop.permute.xlu0 %1705
  %1709 = vset.pattern.permute.xlu0 0
  %1710 = vperm.xlu0 %1709, %v1564
  %v1711 = vpop.permute.xlu0 %1710
  %1714 = vset.pattern.permute.xlu0 0
  %1715 = vperm.xlu0 %1714, %v1565
  %v1716 = vpop.permute.xlu0 %1715
  %1719 = vset.pattern.permute.xlu0 0
  %1720 = vperm.xlu0 %1719, %v1566
  %v1721 = vpop.permute.xlu0 %1720
  %1724 = vset.pattern.permute.xlu0 0
  %1725 = vperm.xlu0 %1724, %v1567
  %v1726 = vpop.permute.xlu0 %1725
  %v1728 = vmul.f32 %v1504, %v1571
  %v1729 = vmul.f32 %v1505, %v1576
  %v1730 = vmul.f32 %v1506, %v1581
  %v1731 = vmul.f32 %v1507, %v1586
  %v1732 = vmul.f32 %v1508, %v1591
  %v1733 = vmul.f32 %v1509, %v1596
  %v1734 = vmul.f32 %v1510, %v1601
  %v1735 = vmul.f32 %v1511, %v1606
  %v1736 = vmul.f32 %v1512, %v1611
  %v1737 = vmul.f32 %v1513, %v1616
  %v1738 = vmul.f32 %v1514, %v1621
  %v1739 = vmul.f32 %v1515, %v1626
  %v1740 = vmul.f32 %v1516, %v1631
  %v1741 = vmul.f32 %v1517, %v1636
  %v1742 = vmul.f32 %v1518, %v1641
  %v1743 = vmul.f32 %v1519, %v1646
  %v1744 = vmul.f32 %v1520, %v1651
  %v1745 = vmul.f32 %v1521, %v1656
  %v1746 = vmul.f32 %v1522, %v1661
  %v1747 = vmul.f32 %v1523, %v1666
  %v1748 = vmul.f32 %v1524, %v1671
  %v1749 = vmul.f32 %v1525, %v1676
  %v1750 = vmul.f32 %v1526, %v1681
  %v1751 = vmul.f32 %v1527, %v1686
  %v1752 = vmul.f32 %v1528, %v1691
  %v1753 = vmul.f32 %v1529, %v1696
  %v1754 = vmul.f32 %v1530, %v1701
  %v1755 = vmul.f32 %v1531, %v1706
  %v1756 = vmul.f32 %v1532, %v1711
  %v1757 = vmul.f32 %v1533, %v1716
  %v1758 = vmul.f32 %v1534, %v1721
  %v1759 = vmul.f32 %v1535, %v1726
  %v1760 = vadd.f32 %v1728, %v1729
  %v1761 = vadd.f32 %v1760, %v1730
  %v1762 = vadd.f32 %v1761, %v1731
  %v1763 = vadd.f32 %v1762, %v1732
  %v1764 = vadd.f32 %v1763, %v1733
  %v1765 = vadd.f32 %v1764, %v1734
  %v1766 = vadd.f32 %v1765, %v1735
  %v1767 = vadd.f32 %v1766, %v1736
  %v1768 = vadd.f32 %v1767, %v1737
  %v1769 = vadd.f32 %v1768, %v1738
  %v1770 = vadd.f32 %v1769, %v1739
  %v1771 = vadd.f32 %v1770, %v1740
  %v1772 = vadd.f32 %v1771, %v1741
  %v1773 = vadd.f32 %v1772, %v1742
  %v1774 = vadd.f32 %v1773, %v1743
  %v1775 = vadd.f32 %v1774, %v1744
  %v1776 = vadd.f32 %v1775, %v1745
  %v1777 = vadd.f32 %v1776, %v1746
  %v1778 = vadd.f32 %v1777, %v1747
  %v1779 = vadd.f32 %v1778, %v1748
  %v1780 = vadd.f32 %v1779, %v1749
  %v1781 = vadd.f32 %v1780, %v1750
  %v1782 = vadd.f32 %v1781, %v1751
  %v1783 = vadd.f32 %v1782, %v1752
  %v1784 = vadd.f32 %v1783, %v1753
  %v1785 = vadd.f32 %v1784, %v1754
  %v1786 = vadd.f32 %v1785, %v1755
  %v1787 = vadd.f32 %v1786, %v1756
  %v1788 = vadd.f32 %v1787, %v1757
  %v1789 = vadd.f32 %v1788, %v1758
  %v1790 = vadd.f32 %v1789, %v1759
  %v1791 = vrot.slane %v1790, 4
  %v1792 = vadd.f32 %v1790, %v1791
  %v1793 = vrot.slane %v1792, 2
  %v1794 = vadd.f32 %v1792, %v1793
  %v1795 = vrot.slane %v1794, 1
  %v1796 = vadd.f32 %v1794, %v1795
  %s1797 = sld [smem:[#allocation2]]
  %v1798 = vstv %s1797
  %v1799 = vadd.f32 %v1796, %v1798
  %1800 = vst [vmem:[%s9] sm:$0x1] %v1799
  // Predicated region
  $region38: #{critic_forward.1} parent=0 // pred_check
    _
  $region39: #{critic_forward.1} parent=0 // pred_check_branch
    %1802 = sbr.rel (0) target = $region41
  $region40: #{critic_forward.1} parent=0 // pred_region
    _
  $region41: #{critic_forward.1} parent=0 // pred_fallthru
    _
  // Predicated region
  $region42: #{critic_forward.1} parent=0 // pred_check
    _
  $region43: #{critic_forward.1} parent=0 // pred_check_branch
    %1804 = sbr.rel (0) target = $region45
  $region44: #{critic_forward.1} parent=0 // pred_region
    _
  $region45: #{critic_forward.1} parent=0 // pred_fallthru
    _

</llo_original>
